<compile_context>
chip_gen: v7x
topology: tpu7x:2x2x1
jax: 0.10.0
libtpu: 0.0.40
codegen_flags: <defaults>
</compile_context>

<pallas_src>
import jax
import jax.numpy as jnp
import numpy as np
from jax.experimental import pallas as pl
from jax.experimental.pallas import tpu as pltpu


# ----------------------------------------------------------------------------
# Model hyperparameters (kept tiny, consistent with "YOLOv1-small")
# ----------------------------------------------------------------------------
S_GRID = 4                               # output grid
N_BOXES = 2
N_CLASSES = 3
OUT_PER_CELL = 5 * N_BOXES + N_CLASSES   # 13
D_OUT = S_GRID * S_GRID * OUT_PER_CELL   # 208
D_OUT_PAD = 256                          # lane-dense head output (review item 9)

C_IN, C1, C2 = 4, 8, 16
H_IN = W_IN = 16
LEAKY_SLOPE = 0.1

_H2, _W2 = H_IN // 2, W_IN // 2          # 8, 8
_K1 = C_IN * (W_IN + 2)                  # 72   (channel-planar padded row)
_K2 = (_W2 + 2) * C1                     # 80   (x-major padded row)
_F2 = S_GRID * C2                        # 64   (per-row pooled features)


# ----------------------------------------------------------------------------
# Fused Pallas kernel: conv1 + LReLU + pool1 + conv2 + LReLU + pool2 + FC head
# ----------------------------------------------------------------------------
def _yolo_fused_kernel(x_ref, w1e_ref, w1o_ref, b1_ref, w2e_ref, w2o_ref, b2_ref,
                       wh_ref, bh_ref, out_ref,
                       xpad1_ref, lhs1_ref, c1_ref, xpad2_ref, lhs2_ref, c2_ref,
                       hl_ref):
    n = x_ref.shape[0]

    def leaky(v):                                  # LeakyReLU(0.1), VPU
        return jnp.maximum(v, LEAKY_SLOPE * v)

    # ---- Stage 1: NCHW input -> channel-planar, zero-padded rows ----------
    # xpad1 lane index = c*(W+2) + padded_x ; buffer is lane-dense (72 lanes),
    # so the full zero-fill is ~25 KB of stores (vs ~300 KB in the NHWC v2
    # layout) and the border zeros ARE the conv padding.
    xpad1_ref[...] = jnp.zeros_like(xpad1_ref)
    for c in range(C_IN):
        lo = c * (W_IN + 2) + 1
        xpad1_ref[:, 1:1 + H_IN, lo:lo + W_IN] = x_ref[:, c, :, :]

    # ---- Stage 2: conv1 as block-Toeplitz matmuls (taps folded into K=216).
    # Even/odd output-column weights make the horizontal half of the 2x2
    # max-pool a free element-wise max.
    for dy in range(3):
        lhs1_ref[:, dy * _K1:(dy + 1) * _K1] = (
            xpad1_ref[:, dy:dy + H_IN, :].reshape(n * H_IN, _K1))
    lhs1 = lhs1_ref[...]                                          # (n*16, 216)
    a1e = jnp.dot(lhs1, w1e_ref[...], preferred_element_type=jnp.float32)
    a1o = jnp.dot(lhs1, w1o_ref[...], preferred_element_type=jnp.float32)
    o1 = jnp.maximum(leaky(a1e + b1_ref[...]), leaky(a1o + b1_ref[...]))
    c1_ref[...] = o1.reshape(n, H_IN, _W2 * C1)                   # (n,16,64)

    # ---- Stage 3: vertical half of pool1 (strided sublane max) straight
    # into the zero-padded conv2 input rows (x-major, lane-dense, 80 lanes).
    xpad2_ref[...] = jnp.zeros_like(xpad2_ref)
    xpad2_ref[:, 1:1 + _H2, C1:C1 + _W2 * C1] = jnp.maximum(
        c1_ref[:, pl.ds(0, _H2, stride=2), :],
        c1_ref[:, pl.ds(1, _H2, stride=2), :])

    # ---- Stage 4: conv2, same block-Toeplitz scheme (K=240). --------------
    for dy in range(3):
        lhs2_ref[:, dy * _K2:(dy + 1) * _K2] = (
            xpad2_ref[:, dy:dy + _H2, :].reshape(n * _H2, _K2))
    lhs2 = lhs2_ref[...]                                          # (n*8, 240)
    a2e = jnp.dot(lhs2, w2e_ref[...], preferred_element_type=jnp.float32)
    a2o = jnp.dot(lhs2, w2o_ref[...], preferred_element_type=jnp.float32)
    o2 = jnp.maximum(leaky(a2e + b2_ref[...]), leaky(a2o + b2_ref[...]))
    c2_ref[...] = o2.reshape(n, _H2, _F2)                         # (n,8,64)

    # ---- Stage 5: vertical half of pool2 + flatten into 256 dense lanes.
    # (The torch NCHW-flatten permutation is folded into the head weight.)
    for y4 in range(S_GRID):
        hl_ref[:, y4 * _F2:(y4 + 1) * _F2] = jnp.maximum(
            c2_ref[:, 2 * y4, :], c2_ref[:, 2 * y4 + 1, :])

    # ---- Stage 6: FC head — ONE K=256 matmul, 256-lane unmasked store. ----
    out_ref[...] = jnp.dot(hl_ref[...], wh_ref[...],
                           preferred_element_type=jnp.float32) + bh_ref[...]


_VMEM = pl.BlockSpec(memory_space=pltpu.MemorySpace.VMEM)


def _yolo_fused(x_nchw, p):
    n = x_nchw.shape[0]
    return pl.pallas_call(
        _yolo_fused_kernel,
        out_shape=jax.ShapeDtypeStruct((n, D_OUT_PAD), jnp.float32),
        in_specs=[_VMEM] * 9,
        out_specs=_VMEM,
        scratch_shapes=[
            pltpu.VMEM((n, H_IN + 2, _K1), jnp.float32),      # padded conv1 rows
            pltpu.VMEM((n * H_IN, 3 * _K1), jnp.float32),     # conv1 Toeplitz lhs
            pltpu.VMEM((n, H_IN, _W2 * C1), jnp.float32),     # conv1 act (x-pooled)
            pltpu.VMEM((n, _H2 + 2, _K2), jnp.float32),       # padded conv2 rows
            pltpu.VMEM((n * _H2, 3 * _K2), jnp.float32),      # conv2 Toeplitz lhs
            pltpu.VMEM((n, _H2, _F2), jnp.float32),           # conv2 act (x-pooled)
            pltpu.VMEM((n, D_OUT_PAD), jnp.float32),          # flattened head input
        ],
    )(x_nchw, p["w1e"], p["w1o"], p["b1"], p["w2e"], p["w2o"], p["b2"],
      p["w_head"], p["b_head"])


# ----------------------------------------------------------------------------
# Parameters: native torch layouts + one-time host-side repack
# ----------------------------------------------------------------------------
def init_params(key):
    """Parameters in native PyTorch layouts (Conv2d: (Cout,Cin,kh,kw); Linear: (out,in))."""
    k1, k2, k3, k4, k5, k6 = jax.random.split(key, 6)
    feat = C2 * S_GRID * S_GRID
    return {
        "conv1_w": 0.1 * jax.random.normal(k1, (C1, C_IN, 3, 3), jnp.float32),
        "conv1_b": 0.1 * jax.random.normal(k2, (C1,), jnp.float32),
        "conv2_w": 0.1 * jax.random.normal(k3, (C2, C1, 3, 3), jnp.float32),
        "conv2_b": 0.1 * jax.random.normal(k4, (C2,), jnp.float32),
        "fc_w": 0.05 * jax.random.normal(k5, (D_OUT, feat), jnp.float32),
        "fc_b": 0.05 * jax.random.normal(k6, (D_OUT,), jnp.float32),
    }


def pack_params(tp):
    """One-time repack of torch-layout params into the kernel's matmul layouts.

    * conv -> block-Toeplitz weight over (tap_dy, padded-row lane), split into
      even / odd output columns so the horizontal 2x2-pool is a free max.
    * fc   -> (256, 256): rows reordered from torch's NCHW flatten to the
      kernel's (y, x, c) lane order, columns zero-padded 208 -> 256.
    """
    w1 = np.asarray(tp["conv1_w"], np.float32)      # (C1, Cin, 3, 3)
    b1 = np.asarray(tp["conv1_b"], np.float32)
    w2 = np.asarray(tp["conv2_w"], np.float32)      # (C2, C1, 3, 3)
    b2 = np.asarray(tp["conv2_b"], np.float32)
    fw = np.asarray(tp["fc_w"], np.float32)         # (208, 256)
    fb = np.asarray(tp["fc_b"], np.float32)

    # conv1 Toeplitz: rows (dy, c, padded_x) = 216, cols (x, co) = 128
    wp = W_IN + 2
    t1 = np.zeros((3, C_IN, wp, W_IN, C1), np.float32)
    for dy in range(3):
        for kx in range(3):
            for x in range(W_IN):
                t1[dy, :, x + kx, x, :] = w1[:, :, dy, kx].T    # (c, co)
    t1 = t1.reshape(3 * C_IN * wp, W_IN, C1)
    w1e = t1[:, 0::2, :].reshape(-1, _W2 * C1)                  # (216, 64)
    w1o = t1[:, 1::2, :].reshape(-1, _W2 * C1)
    b1p = np.tile(b1, _W2).reshape(1, -1)                       # (1, 64)

    # conv2 Toeplitz: rows (dy, padded_x, c) = 240, cols (x2, co) = 128
    w2p = _W2 + 2
    t2 = np.zeros((3, w2p, C1, _W2, C2), np.float32)
    for dy in range(3):
        for kx in range(3):
            for x2 in range(_W2):
                t2[dy, x2 + kx, :, x2, :] = w2[:, :, dy, kx].T  # (c, co)
    t2 = t2.reshape(3 * w2p * C1, _W2, C2)
    w2e = t2[:, 0::2, :].reshape(-1, _F2)                       # (240, 64)
    w2o = t2[:, 1::2, :].reshape(-1, _F2)
    b2p = np.tile(b2, S_GRID).reshape(1, -1)                    # (1, 64)

    # head: fc input flat index (torch NCHW flatten) = co*16 + y*4 + x
    # kernel lane index                               = y*64 + x*16 + co
    wt = fw.T.reshape(C2, S_GRID, S_GRID, D_OUT)                # (co, y, x, 208)
    wt = wt.transpose(1, 2, 0, 3).reshape(S_GRID * S_GRID * C2, D_OUT)
    wh = np.zeros((S_GRID * S_GRID * C2, D_OUT_PAD), np.float32)
    wh[:, :D_OUT] = wt
    bh = np.zeros((1, D_OUT_PAD), np.float32)
    bh[0, :D_OUT] = fb

    packed = dict(w1e=w1e, w1o=w1o, b1=b1p, w2e=w2e, w2o=w2o, b2=b2p,
                  w_head=wh, b_head=bh)
    return {k: jnp.asarray(v) for k, v in packed.items()}


# ----------------------------------------------------------------------------
# Forward pass (QuantStub / DeQuantStub of an un-prepared QAT module: identity)
# ----------------------------------------------------------------------------
@jax.jit
def yolov1_small_qat_forward(x_nchw, packed_params):
    n = x_nchw.shape[0]
    out = _yolo_fused(x_nchw.astype(jnp.float32), packed_params)    # (n, 256)
    return out[:, :D_OUT].reshape(n, S_GRID, S_GRID, OUT_PER_CELL)


# ----------------------------------------------------------------------------
# Pure-JAX reference (torch semantics) used as an in-script correctness check
# ----------------------------------------------------------------------------
def _reference_forward(x_nchw, tp):
    def conv(x_nhwc, wc, b):
        n, h, w, _ = x_nhwc.shape
        xp = jnp.pad(x_nhwc, ((0, 0), (1, 1), (1, 1), (0, 0)))
        out = jnp.zeros((n, h, w, wc.shape[0]), jnp.float32)
        for ky in range(3):
            for kx in range(3):
                out = out + jnp.einsum("nhwc,oc->nhwo",
                                       xp[:, ky:ky + h, kx:kx + w, :],
                                       wc[:, :, ky, kx], precision="highest")
        return out + b

    def leaky(v):
        return jnp.where(v > 0, v, LEAKY_SLOPE * v)

    def pool(v):
        return jnp.maximum(
            jnp.maximum(v[:, 0::2, 0::2, :], v[:, 0::2, 1::2, :]),
            jnp.maximum(v[:, 1::2, 0::2, :], v[:, 1::2, 1::2, :]))

    x = jnp.transpose(x_nchw, (0, 2, 3, 1)).astype(jnp.float32)
    y = pool(leaky(conv(x, tp["conv1_w"], tp["conv1_b"])))
    y = pool(leaky(conv(y, tp["conv2_w"], tp["conv2_b"])))
    feat = jnp.transpose(y, (0, 3, 1, 2)).reshape(x.shape[0], -1)   # torch NCHW flatten
    out = jnp.dot(feat, tp["fc_w"].T, precision="highest") + tp["fc_b"]
    return out.reshape(x.shape[0], S_GRID, S_GRID, OUT_PER_CELL)


# ----------------------------------------------------------------------------
if __name__ == "__main__":
    key = jax.random.PRNGKey(0)
    k_x, k_p = jax.random.split(key)
    x = jax.random.normal(k_x, (2, C_IN, H_IN, W_IN), jnp.float32)  # NCHW like torch
    torch_params = init_params(k_p)
    params = pack_params(torch_params)          # one-time layout fold (off hot path)

    out = yolov1_small_qat_forward(x, params)
    out = jax.block_until_ready(out)

    assert out.shape == (2, S_GRID, S_GRID, OUT_PER_CELL), out.shape
    assert out.dtype == jnp.float32

    ref = jax.block_until_ready(_reference_forward(x, torch_params))
    err = float(jnp.max(jnp.abs(out - ref)))
    assert jnp.allclose(out, ref, atol=2e-2, rtol=2e-2), err

    print("KERNEL_OK")
</pallas_src>

<mosaic_0001>
module attributes {stable_mosaic.version = 11 : i64} {
  func.func @_yolo_fused_kernel(%arg0: memref<2x4x16x16xf32, #tpu.memory_space<vmem>>, %arg1: memref<216x64xf32, #tpu.memory_space<vmem>>, %arg2: memref<216x64xf32, #tpu.memory_space<vmem>>, %arg3: memref<1x64xf32, #tpu.memory_space<vmem>>, %arg4: memref<240x64xf32, #tpu.memory_space<vmem>>, %arg5: memref<240x64xf32, #tpu.memory_space<vmem>>, %arg6: memref<1x64xf32, #tpu.memory_space<vmem>>, %arg7: memref<256x256xf32, #tpu.memory_space<vmem>>, %arg8: memref<1x256xf32, #tpu.memory_space<vmem>>, %arg9: memref<2x256xf32, #tpu.memory_space<vmem>>, %arg10: memref<2x18x72xf32, #tpu.memory_space<vmem>>, %arg11: memref<32x216xf32, #tpu.memory_space<vmem>>, %arg12: memref<2x16x64xf32, #tpu.memory_space<vmem>>, %arg13: memref<2x10x80xf32, #tpu.memory_space<vmem>>, %arg14: memref<16x240xf32, #tpu.memory_space<vmem>>, %arg15: memref<2x8x64xf32, #tpu.memory_space<vmem>>, %arg16: memref<2x256xf32, #tpu.memory_space<vmem>>) attributes {dimension_semantics = [], scalar_prefetch = 0 : i64, scratch_operands = 7 : i64, tpu.core_type = #tpu.core_type<tc>} {
    %cst = arith.constant 0.000000e+00 : f32
    %0 = vector.broadcast %cst : f32 to vector<2x18x72xf32>
    %c0 = arith.constant 0 : index
    %c0_0 = arith.constant 0 : index
    %c0_1 = arith.constant 0 : index
    %1 = vector.load %arg10[%c0, %c0_0, %c0_1] : memref<2x18x72xf32, #tpu.memory_space<vmem>>, vector<2x18x72xf32>
    tpu.vector_store %arg10[%c0, %c0_0, %c0_1], %0 {strides = array<i32>} : memref<2x18x72xf32, #tpu.memory_space<vmem>>, vector<2x18x72xf32>,
    %c0_2 = arith.constant 0 : index
    %c0_3 = arith.constant 0 : index
    %c0_4 = arith.constant 0 : index
    %c0_5 = arith.constant 0 : index
    %2 = vector.load %arg0[%c0_2, %c0_3, %c0_4, %c0_5] : memref<2x4x16x16xf32, #tpu.memory_space<vmem>>, vector<2x1x16x16xf32>
    %3 = vector.shape_cast %2 : vector<2x1x16x16xf32> to vector<2x16x16xf32>
    %c0_6 = arith.constant 0 : index
    %c1 = arith.constant 1 : index
    %c1_7 = arith.constant 1 : index
    %4 = vector.load %arg10[%c0_6, %c1, %c1_7] : memref<2x18x72xf32, #tpu.memory_space<vmem>>, vector<2x16x16xf32>
    tpu.vector_store %arg10[%c0_6, %c1, %c1_7], %3 {strides = array<i32>} : memref<2x18x72xf32, #tpu.memory_space<vmem>>, vector<2x16x16xf32>,
    %c0_8 = arith.constant 0 : index
    %c1_9 = arith.constant 1 : index
    %c0_10 = arith.constant 0 : index
    %c0_11 = arith.constant 0 : index
    %5 = vector.load %arg0[%c0_8, %c1_9, %c0_10, %c0_11] : memref<2x4x16x16xf32, #tpu.memory_space<vmem>>, vector<2x1x16x16xf32>
    %6 = vector.shape_cast %5 : vector<2x1x16x16xf32> to vector<2x16x16xf32>
    %c0_12 = arith.constant 0 : index
    %c1_13 = arith.constant 1 : index
    %c19 = arith.constant 19 : index
    %7 = vector.load %arg10[%c0_12, %c1_13, %c19] : memref<2x18x72xf32, #tpu.memory_space<vmem>>, vector<2x16x16xf32>
    tpu.vector_store %arg10[%c0_12, %c1_13, %c19], %6 {strides = array<i32>} : memref<2x18x72xf32, #tpu.memory_space<vmem>>, vector<2x16x16xf32>,
    %c0_14 = arith.constant 0 : index
    %c2 = arith.constant 2 : index
    %c0_15 = arith.constant 0 : index
    %c0_16 = arith.constant 0 : index
    %8 = vector.load %arg0[%c0_14, %c2, %c0_15, %c0_16] : memref<2x4x16x16xf32, #tpu.memory_space<vmem>>, vector<2x1x16x16xf32>
    %9 = vector.shape_cast %8 : vector<2x1x16x16xf32> to vector<2x16x16xf32>
    %c0_17 = arith.constant 0 : index
    %c1_18 = arith.constant 1 : index
    %c37 = arith.constant 37 : index
    %10 = vector.load %arg10[%c0_17, %c1_18, %c37] : memref<2x18x72xf32, #tpu.memory_space<vmem>>, vector<2x16x16xf32>
    tpu.vector_store %arg10[%c0_17, %c1_18, %c37], %9 {strides = array<i32>} : memref<2x18x72xf32, #tpu.memory_space<vmem>>, vector<2x16x16xf32>,
    %c0_19 = arith.constant 0 : index
    %c3 = arith.constant 3 : index
    %c0_20 = arith.constant 0 : index
    %c0_21 = arith.constant 0 : index
    %11 = vector.load %arg0[%c0_19, %c3, %c0_20, %c0_21] : memref<2x4x16x16xf32, #tpu.memory_space<vmem>>, vector<2x1x16x16xf32>
    %12 = vector.shape_cast %11 : vector<2x1x16x16xf32> to vector<2x16x16xf32>
    %c0_22 = arith.constant 0 : index
    %c1_23 = arith.constant 1 : index
    %c55 = arith.constant 55 : index
    %13 = vector.load %arg10[%c0_22, %c1_23, %c55] : memref<2x18x72xf32, #tpu.memory_space<vmem>>, vector<2x16x16xf32>
    tpu.vector_store %arg10[%c0_22, %c1_23, %c55], %12 {strides = array<i32>} : memref<2x18x72xf32, #tpu.memory_space<vmem>>, vector<2x16x16xf32>,
    %c0_24 = arith.constant 0 : index
    %c0_25 = arith.constant 0 : index
    %c0_26 = arith.constant 0 : index
    %14 = vector.load %arg10[%c0_24, %c0_25, %c0_26] : memref<2x18x72xf32, #tpu.memory_space<vmem>>, vector<2x16x72xf32>
    %15 = vector.shape_cast %14 : vector<2x16x72xf32> to vector<32x72xf32>
    %c0_27 = arith.constant 0 : index
    %c0_28 = arith.constant 0 : index
    %16 = vector.load %arg11[%c0_27, %c0_28] : memref<32x216xf32, #tpu.memory_space<vmem>>, vector<32x72xf32>
    tpu.vector_store %arg11[%c0_27, %c0_28], %15 {strides = array<i32>} : memref<32x216xf32, #tpu.memory_space<vmem>>, vector<32x72xf32>,
    %c0_29 = arith.constant 0 : index
    %c1_30 = arith.constant 1 : index
    %c0_31 = arith.constant 0 : index
    %17 = vector.load %arg10[%c0_29, %c1_30, %c0_31] : memref<2x18x72xf32, #tpu.memory_space<vmem>>, vector<2x16x72xf32>
    %18 = vector.shape_cast %17 : vector<2x16x72xf32> to vector<32x72xf32>
    %c0_32 = arith.constant 0 : index
    %c72 = arith.constant 72 : index
    %19 = vector.load %arg11[%c0_32, %c72] : memref<32x216xf32, #tpu.memory_space<vmem>>, vector<32x72xf32>
    tpu.vector_store %arg11[%c0_32, %c72], %18 {strides = array<i32>} : memref<32x216xf32, #tpu.memory_space<vmem>>, vector<32x72xf32>,
    %c0_33 = arith.constant 0 : index
    %c2_34 = arith.constant 2 : index
    %c0_35 = arith.constant 0 : index
    %20 = vector.load %arg10[%c0_33, %c2_34, %c0_35] : memref<2x18x72xf32, #tpu.memory_space<vmem>>, vector<2x16x72xf32>
    %21 = vector.shape_cast %20 : vector<2x16x72xf32> to vector<32x72xf32>
    %c0_36 = arith.constant 0 : index
    %c144 = arith.constant 144 : index
    %22 = vector.load %arg11[%c0_36, %c144] : memref<32x216xf32, #tpu.memory_space<vmem>>, vector<32x72xf32>
    tpu.vector_store %arg11[%c0_36, %c144], %21 {strides = array<i32>} : memref<32x216xf32, #tpu.memory_space<vmem>>, vector<32x72xf32>,
    %c0_37 = arith.constant 0 : index
    %c0_38 = arith.constant 0 : index
    %23 = vector.load %arg11[%c0_37, %c0_38] : memref<32x216xf32, #tpu.memory_space<vmem>>, vector<32x216xf32>
    %c0_39 = arith.constant 0 : index
    %c0_40 = arith.constant 0 : index
    %24 = vector.load %arg1[%c0_39, %c0_40] : memref<216x64xf32, #tpu.memory_space<vmem>>, vector<216x64xf32>
    %cst_41 = arith.constant dense<0.000000e+00> : vector<32x64xf32>
    %25 = tpu.matmul %23, %24, %cst_41 {dimension_numbers = #tpu.dot_dimension_numbers<[1], [0], [0], [1], [0, 0, 1, 1], [], []>} : vector<32x216xf32>, vector<216x64xf32>, vector<32x64xf32> -> vector<32x64xf32>
    %c0_42 = arith.constant 0 : index
    %c0_43 = arith.constant 0 : index
    %26 = vector.load %arg2[%c0_42, %c0_43] : memref<216x64xf32, #tpu.memory_space<vmem>>, vector<216x64xf32>
    %cst_44 = arith.constant dense<0.000000e+00> : vector<32x64xf32>
    %27 = tpu.matmul %23, %26, %cst_44 {dimension_numbers = #tpu.dot_dimension_numbers<[1], [0], [0], [1], [0, 0, 1, 1], [], []>} : vector<32x216xf32>, vector<216x64xf32>, vector<32x64xf32> -> vector<32x64xf32>
    %c0_45 = arith.constant 0 : index
    %c0_46 = arith.constant 0 : index
    %28 = vector.load %arg3[%c0_45, %c0_46] : memref<1x64xf32, #tpu.memory_space<vmem>>, vector<1x64xf32>
    %29 = vector.broadcast %28 : vector<1x64xf32> to vector<32x64xf32>
    %30 = arith.addf %25, %29 : vector<32x64xf32>
    %cst_47 = arith.constant 1.000000e-01 : f32
    %31 = vector.broadcast %cst_47 : f32 to vector<32x64xf32>
    %32 = arith.mulf %31, %30 : vector<32x64xf32>
    %33 = arith.maximumf %30, %32 : vector<32x64xf32>
    %c0_48 = arith.constant 0 : index
    %c0_49 = arith.constant 0 : index
    %34 = vector.load %arg3[%c0_48, %c0_49] : memref<1x64xf32, #tpu.memory_space<vmem>>, vector<1x64xf32>
    %35 = vector.broadcast %34 : vector<1x64xf32> to vector<32x64xf32>
    %36 = arith.addf %27, %35 : vector<32x64xf32>
    %cst_50 = arith.constant 1.000000e-01 : f32
    %37 = vector.broadcast %cst_50 : f32 to vector<32x64xf32>
    %38 = arith.mulf %37, %36 : vector<32x64xf32>
    %39 = arith.maximumf %36, %38 : vector<32x64xf32>
    %40 = arith.maximumf %33, %39 : vector<32x64xf32>
    %41 = vector.shape_cast %40 : vector<32x64xf32> to vector<2x16x64xf32>
    %c0_51 = arith.constant 0 : index
    %c0_52 = arith.constant 0 : index
    %c0_53 = arith.constant 0 : index
    %42 = vector.load %arg12[%c0_51, %c0_52, %c0_53] : memref<2x16x64xf32, #tpu.memory_space<vmem>>, vector<2x16x64xf32>
    tpu.vector_store %arg12[%c0_51, %c0_52, %c0_53], %41 {strides = array<i32>} : memref<2x16x64xf32, #tpu.memory_space<vmem>>, vector<2x16x64xf32>,
    %cst_54 = arith.constant 0.000000e+00 : f32
    %43 = vector.broadcast %cst_54 : f32 to vector<2x10x80xf32>
    %c0_55 = arith.constant 0 : index
    %c0_56 = arith.constant 0 : index
    %c0_57 = arith.constant 0 : index
    %44 = vector.load %arg13[%c0_55, %c0_56, %c0_57] : memref<2x10x80xf32, #tpu.memory_space<vmem>>, vector<2x10x80xf32>
    tpu.vector_store %arg13[%c0_55, %c0_56, %c0_57], %43 {strides = array<i32>} : memref<2x10x80xf32, #tpu.memory_space<vmem>>, vector<2x10x80xf32>,
    %c0_58 = arith.constant 0 : index
    %c0_59 = arith.constant 0 : index
    %c0_60 = arith.constant 0 : index
    %45 = tpu.strided_load %arg12[%c0_58, %c0_59, %c0_60] {strides = array<i32: 1, 2, 1>} : memref<2x16x64xf32, #tpu.memory_space<vmem>>, vector<2x8x64xf32>
    %c0_61 = arith.constant 0 : index
    %c1_62 = arith.constant 1 : index
    %c0_63 = arith.constant 0 : index
    %46 = tpu.strided_load %arg12[%c0_61, %c1_62, %c0_63] {strides = array<i32: 1, 2, 1>} : memref<2x16x64xf32, #tpu.memory_space<vmem>>, vector<2x8x64xf32>
    %47 = arith.maximumf %45, %46 : vector<2x8x64xf32>
    %c0_64 = arith.constant 0 : index
    %c1_65 = arith.constant 1 : index
    %c8 = arith.constant 8 : index
    %48 = vector.load %arg13[%c0_64, %c1_65, %c8] : memref<2x10x80xf32, #tpu.memory_space<vmem>>, vector<2x8x64xf32>
    tpu.vector_store %arg13[%c0_64, %c1_65, %c8], %47 {strides = array<i32>} : memref<2x10x80xf32, #tpu.memory_space<vmem>>, vector<2x8x64xf32>,
    %c0_66 = arith.constant 0 : index
    %c0_67 = arith.constant 0 : index
    %c0_68 = arith.constant 0 : index
    %49 = vector.load %arg13[%c0_66, %c0_67, %c0_68] : memref<2x10x80xf32, #tpu.memory_space<vmem>>, vector<2x8x80xf32>
    %50 = vector.shape_cast %49 : vector<2x8x80xf32> to vector<16x80xf32>
    %c0_69 = arith.constant 0 : index
    %c0_70 = arith.constant 0 : index
    %51 = vector.load %arg14[%c0_69, %c0_70] : memref<16x240xf32, #tpu.memory_space<vmem>>, vector<16x80xf32>
    tpu.vector_store %arg14[%c0_69, %c0_70], %50 {strides = array<i32>} : memref<16x240xf32, #tpu.memory_space<vmem>>, vector<16x80xf32>,
    %c0_71 = arith.constant 0 : index
    %c1_72 = arith.constant 1 : index
    %c0_73 = arith.constant 0 : index
    %52 = vector.load %arg13[%c0_71, %c1_72, %c0_73] : memref<2x10x80xf32, #tpu.memory_space<vmem>>, vector<2x8x80xf32>
    %53 = vector.shape_cast %52 : vector<2x8x80xf32> to vector<16x80xf32>
    %c0_74 = arith.constant 0 : index
    %c80 = arith.constant 80 : index
    %54 = vector.load %arg14[%c0_74, %c80] : memref<16x240xf32, #tpu.memory_space<vmem>>, vector<16x80xf32>
    tpu.vector_store %arg14[%c0_74, %c80], %53 {strides = array<i32>} : memref<16x240xf32, #tpu.memory_space<vmem>>, vector<16x80xf32>,
    %c0_75 = arith.constant 0 : index
    %c2_76 = arith.constant 2 : index
    %c0_77 = arith.constant 0 : index
    %55 = vector.load %arg13[%c0_75, %c2_76, %c0_77] : memref<2x10x80xf32, #tpu.memory_space<vmem>>, vector<2x8x80xf32>
    %56 = vector.shape_cast %55 : vector<2x8x80xf32> to vector<16x80xf32>
    %c0_78 = arith.constant 0 : index
    %c160 = arith.constant 160 : index
    %57 = vector.load %arg14[%c0_78, %c160] : memref<16x240xf32, #tpu.memory_space<vmem>>, vector<16x80xf32>
    tpu.vector_store %arg14[%c0_78, %c160], %56 {strides = array<i32>} : memref<16x240xf32, #tpu.memory_space<vmem>>, vector<16x80xf32>,
    %c0_79 = arith.constant 0 : index
    %c0_80 = arith.constant 0 : index
    %58 = vector.load %arg14[%c0_79, %c0_80] : memref<16x240xf32, #tpu.memory_space<vmem>>, vector<16x240xf32>
    %c0_81 = arith.constant 0 : index
    %c0_82 = arith.constant 0 : index
    %59 = vector.load %arg4[%c0_81, %c0_82] : memref<240x64xf32, #tpu.memory_space<vmem>>, vector<240x64xf32>
    %cst_83 = arith.constant dense<0.000000e+00> : vector<16x64xf32>
    %60 = tpu.matmul %58, %59, %cst_83 {dimension_numbers = #tpu.dot_dimension_numbers<[1], [0], [0], [1], [0, 0, 1, 1], [], []>} : vector<16x240xf32>, vector<240x64xf32>, vector<16x64xf32> -> vector<16x64xf32>
    %c0_84 = arith.constant 0 : index
    %c0_85 = arith.constant 0 : index
    %61 = vector.load %arg5[%c0_84, %c0_85] : memref<240x64xf32, #tpu.memory_space<vmem>>, vector<240x64xf32>
    %cst_86 = arith.constant dense<0.000000e+00> : vector<16x64xf32>
    %62 = tpu.matmul %58, %61, %cst_86 {dimension_numbers = #tpu.dot_dimension_numbers<[1], [0], [0], [1], [0, 0, 1, 1], [], []>} : vector<16x240xf32>, vector<240x64xf32>, vector<16x64xf32> -> vector<16x64xf32>
    %c0_87 = arith.constant 0 : index
    %c0_88 = arith.constant 0 : index
    %63 = vector.load %arg6[%c0_87, %c0_88] : memref<1x64xf32, #tpu.memory_space<vmem>>, vector<1x64xf32>
    %64 = vector.broadcast %63 : vector<1x64xf32> to vector<16x64xf32>
    %65 = arith.addf %60, %64 : vector<16x64xf32>
    %cst_89 = arith.constant 1.000000e-01 : f32
    %66 = vector.broadcast %cst_89 : f32 to vector<16x64xf32>
    %67 = arith.mulf %66, %65 : vector<16x64xf32>
    %68 = arith.maximumf %65, %67 : vector<16x64xf32>
    %c0_90 = arith.constant 0 : index
    %c0_91 = arith.constant 0 : index
    %69 = vector.load %arg6[%c0_90, %c0_91] : memref<1x64xf32, #tpu.memory_space<vmem>>, vector<1x64xf32>
    %70 = vector.broadcast %69 : vector<1x64xf32> to vector<16x64xf32>
    %71 = arith.addf %62, %70 : vector<16x64xf32>
    %cst_92 = arith.constant 1.000000e-01 : f32
    %72 = vector.broadcast %cst_92 : f32 to vector<16x64xf32>
    %73 = arith.mulf %72, %71 : vector<16x64xf32>
    %74 = arith.maximumf %71, %73 : vector<16x64xf32>
    %75 = arith.maximumf %68, %74 : vector<16x64xf32>
    %76 = vector.shape_cast %75 : vector<16x64xf32> to vector<2x8x64xf32>
    %c0_93 = arith.constant 0 : index
    %c0_94 = arith.constant 0 : index
    %c0_95 = arith.constant 0 : index
    %77 = vector.load %arg15[%c0_93, %c0_94, %c0_95] : memref<2x8x64xf32, #tpu.memory_space<vmem>>, vector<2x8x64xf32>
    tpu.vector_store %arg15[%c0_93, %c0_94, %c0_95], %76 {strides = array<i32>} : memref<2x8x64xf32, #tpu.memory_space<vmem>>, vector<2x8x64xf32>,
    %c0_96 = arith.constant 0 : index
    %c0_97 = arith.constant 0 : index
    %c0_98 = arith.constant 0 : index
    %78 = vector.load %arg15[%c0_96, %c0_97, %c0_98] : memref<2x8x64xf32, #tpu.memory_space<vmem>>, vector<2x1x64xf32>
    %79 = vector.shape_cast %78 : vector<2x1x64xf32> to vector<2x64xf32>
    %c0_99 = arith.constant 0 : index
    %c1_100 = arith.constant 1 : index
    %c0_101 = arith.constant 0 : index
    %80 = vector.load %arg15[%c0_99, %c1_100, %c0_101] : memref<2x8x64xf32, #tpu.memory_space<vmem>>, vector<2x1x64xf32>
    %81 = vector.shape_cast %80 : vector<2x1x64xf32> to vector<2x64xf32>
    %82 = arith.maximumf %79, %81 : vector<2x64xf32>
    %c0_102 = arith.constant 0 : index
    %c0_103 = arith.constant 0 : index
    %83 = vector.load %arg16[%c0_102, %c0_103] : memref<2x256xf32, #tpu.memory_space<vmem>>, vector<2x64xf32>
    tpu.vector_store %arg16[%c0_102, %c0_103], %82 {strides = array<i32>} : memref<2x256xf32, #tpu.memory_space<vmem>>, vector<2x64xf32>,
    %c0_104 = arith.constant 0 : index
    %c2_105 = arith.constant 2 : index
    %c0_106 = arith.constant 0 : index
    %84 = vector.load %arg15[%c0_104, %c2_105, %c0_106] : memref<2x8x64xf32, #tpu.memory_space<vmem>>, vector<2x1x64xf32>
    %85 = vector.shape_cast %84 : vector<2x1x64xf32> to vector<2x64xf32>
    %c0_107 = arith.constant 0 : index
    %c3_108 = arith.constant 3 : index
    %c0_109 = arith.constant 0 : index
    %86 = vector.load %arg15[%c0_107, %c3_108, %c0_109] : memref<2x8x64xf32, #tpu.memory_space<vmem>>, vector<2x1x64xf32>
    %87 = vector.shape_cast %86 : vector<2x1x64xf32> to vector<2x64xf32>
    %88 = arith.maximumf %85, %87 : vector<2x64xf32>
    %c0_110 = arith.constant 0 : index
    %c64 = arith.constant 64 : index
    %89 = vector.load %arg16[%c0_110, %c64] : memref<2x256xf32, #tpu.memory_space<vmem>>, vector<2x64xf32>
    tpu.vector_store %arg16[%c0_110, %c64], %88 {strides = array<i32>} : memref<2x256xf32, #tpu.memory_space<vmem>>, vector<2x64xf32>,
    %c0_111 = arith.constant 0 : index
    %c4 = arith.constant 4 : index
    %c0_112 = arith.constant 0 : index
    %90 = vector.load %arg15[%c0_111, %c4, %c0_112] : memref<2x8x64xf32, #tpu.memory_space<vmem>>, vector<2x1x64xf32>
    %91 = vector.shape_cast %90 : vector<2x1x64xf32> to vector<2x64xf32>
    %c0_113 = arith.constant 0 : index
    %c5 = arith.constant 5 : index
    %c0_114 = arith.constant 0 : index
    %92 = vector.load %arg15[%c0_113, %c5, %c0_114] : memref<2x8x64xf32, #tpu.memory_space<vmem>>, vector<2x1x64xf32>
    %93 = vector.shape_cast %92 : vector<2x1x64xf32> to vector<2x64xf32>
    %94 = arith.maximumf %91, %93 : vector<2x64xf32>
    %c0_115 = arith.constant 0 : index
    %c128 = arith.constant 128 : index
    %95 = vector.load %arg16[%c0_115, %c128] : memref<2x256xf32, #tpu.memory_space<vmem>>, vector<2x64xf32>
    tpu.vector_store %arg16[%c0_115, %c128], %94 {strides = array<i32>} : memref<2x256xf32, #tpu.memory_space<vmem>>, vector<2x64xf32>,
    %c0_116 = arith.constant 0 : index
    %c6 = arith.constant 6 : index
    %c0_117 = arith.constant 0 : index
    %96 = vector.load %arg15[%c0_116, %c6, %c0_117] : memref<2x8x64xf32, #tpu.memory_space<vmem>>, vector<2x1x64xf32>
    %97 = vector.shape_cast %96 : vector<2x1x64xf32> to vector<2x64xf32>
    %c0_118 = arith.constant 0 : index
    %c7 = arith.constant 7 : index
    %c0_119 = arith.constant 0 : index
    %98 = vector.load %arg15[%c0_118, %c7, %c0_119] : memref<2x8x64xf32, #tpu.memory_space<vmem>>, vector<2x1x64xf32>
    %99 = vector.shape_cast %98 : vector<2x1x64xf32> to vector<2x64xf32>
    %100 = arith.maximumf %97, %99 : vector<2x64xf32>
    %c0_120 = arith.constant 0 : index
    %c192 = arith.constant 192 : index
    %101 = vector.load %arg16[%c0_120, %c192] : memref<2x256xf32, #tpu.memory_space<vmem>>, vector<2x64xf32>
    tpu.vector_store %arg16[%c0_120, %c192], %100 {strides = array<i32>} : memref<2x256xf32, #tpu.memory_space<vmem>>, vector<2x64xf32>,
    %c0_121 = arith.constant 0 : index
    %c0_122 = arith.constant 0 : index
    %102 = vector.load %arg16[%c0_121, %c0_122] : memref<2x256xf32, #tpu.memory_space<vmem>>, vector<2x256xf32>
    %c0_123 = arith.constant 0 : index
    %c0_124 = arith.constant 0 : index
    %103 = vector.load %arg7[%c0_123, %c0_124] : memref<256x256xf32, #tpu.memory_space<vmem>>, vector<256x256xf32>
    %cst_125 = arith.constant dense<0.000000e+00> : vector<2x256xf32>
    %104 = tpu.matmul %102, %103, %cst_125 {dimension_numbers = #tpu.dot_dimension_numbers<[1], [0], [0], [1], [0, 0, 1, 1], [], []>} : vector<2x256xf32>, vector<256x256xf32>, vector<2x256xf32> -> vector<2x256xf32>
    %c0_126 = arith.constant 0 : index
    %c0_127 = arith.constant 0 : index
    %105 = vector.load %arg8[%c0_126, %c0_127] : memref<1x256xf32, #tpu.memory_space<vmem>>, vector<1x256xf32>
    %106 = vector.broadcast %105 : vector<1x256xf32> to vector<2x256xf32>
    %107 = arith.addf %104, %106 : vector<2x256xf32>
    %c0_128 = arith.constant 0 : index
    %c0_129 = arith.constant 0 : index
    %108 = vector.load %arg9[%c0_128, %c0_129] : memref<2x256xf32, #tpu.memory_space<vmem>>, vector<2x256xf32>
    tpu.vector_store %arg9[%c0_128, %c0_129], %107 {strides = array<i32>} : memref<2x256xf32, #tpu.memory_space<vmem>>, vector<2x256xf32>,
    return
  }
}

</mosaic_0001>

<llo_original>
// kernel: yolov1_small_qat_forward.1
$region0: #{yolov1_small_qat_forward.1}
  #allocation0 [shape = 'u32[]', space=smem, size = 0x4, offset = 0x4, fixed_abs, tag = 'smem constant byte address 0x4 - core index']
  #allocation1 [shape = 'u32[144,128]{1,0:T(1,128)}', space=vmem, size = 0x12000, scoped, tag = 'internal scratch']
  #allocation2 [shape = 'f32[2,18,72]{2,1,0:T(8,128)}', space=vmem, size = 0x6000, scoped, tag = 'scratch operand']
  #allocation3 [shape = 'f32[32,216]{1,0:T(8,128)}', space=vmem, size = 0x8000, scoped, tag = 'scratch operand']
  #allocation4 [shape = 'f32[2,16,64]{2,1,0:T(8,128)}', space=vmem, size = 0x4000, scoped, tag = 'scratch operand']
  #allocation5 [shape = 'f32[2,10,80]{2,1,0:T(8,128)}', space=vmem, size = 0x4000, scoped, tag = 'scratch operand']
  #allocation6 [shape = 'f32[16,240]{1,0:T(8,128)}', space=vmem, size = 0x4000, scoped, tag = 'scratch operand']
  #allocation7 [shape = 'f32[2,8,64]{2,1,0:T(8,128)}', space=vmem, size = 0x2000, scoped, tag = 'scratch operand']
  #allocation8 [shape = 'f32[2,256]{1,0:T(2,128)}', space=vmem, size = 0x800, scoped, tag = 'scratch operand']
  %s0 = inlined_call_operand.vmem [shape: f32[2,4,16,16], index: 0, kind: input, shape index: {}]
  %s1 = inlined_call_operand.vmem [shape: f32[216,64], index: 1, kind: input, shape index: {}]
  %s2 = inlined_call_operand.vmem [shape: f32[216,64], index: 2, kind: input, shape index: {}]
  %s3 = inlined_call_operand.vmem [shape: f32[1,64], index: 3, kind: input, shape index: {}]
  %s4 = inlined_call_operand.vmem [shape: f32[240,64], index: 4, kind: input, shape index: {}]
  %s5 = inlined_call_operand.vmem [shape: f32[240,64], index: 5, kind: input, shape index: {}]
  %s6 = inlined_call_operand.vmem [shape: f32[1,64], index: 6, kind: input, shape index: {}]
  %s7 = inlined_call_operand.vmem [shape: f32[256,256], index: 7, kind: input, shape index: {}]
  %s8 = inlined_call_operand.vmem [shape: f32[1,256], index: 8, kind: input, shape index: {}]
  %s9 = inlined_call_operand.vmem [shape: f32[2,256], index: 9, kind: output, shape index: {}]
  %s10 = sld [smem:[#allocation0]]
  $region46: #{yolov1_small_qat_forward.1} parent=0
    _
  %s12 = ssub.s32 1, %s10
  %s13 = scalar_select 0, %s12, %s10
  // Predicated region
  $region2: #{yolov1_small_qat_forward.1} parent=0 // pred_check
    _
  $region3: #{yolov1_small_qat_forward.1} parent=0 // pred_check_branch
    %15 = sbr.rel (0) target = $region5
  $region4: #{yolov1_small_qat_forward.1} parent=0 // pred_region
    _
  $region5: #{yolov1_small_qat_forward.1} parent=0 // pred_fallthru
    _
  // Predicated region
  $region6: #{yolov1_small_qat_forward.1} parent=0 // pred_check
    _
  $region7: #{yolov1_small_qat_forward.1} parent=0 // pred_check_branch
    %17 = sbr.rel (0) target = $region9
  $region8: #{yolov1_small_qat_forward.1} parent=0 // pred_region
    _
  $region9: #{yolov1_small_qat_forward.1} parent=0 // pred_fallthru
    _
  // Predicated region
  $region10: #{yolov1_small_qat_forward.1} parent=0 // pred_check
    _
  $region11: #{yolov1_small_qat_forward.1} parent=0 // pred_check_branch
    %19 = sbr.rel (0) target = $region13
  $region12: #{yolov1_small_qat_forward.1} parent=0 // pred_region
    _
  $region13: #{yolov1_small_qat_forward.1} parent=0 // pred_fallthru
    _
  // Predicated region
  $region14: #{yolov1_small_qat_forward.1} parent=0 // pred_check
    _
  $region15: #{yolov1_small_qat_forward.1} parent=0 // pred_check_branch
    %21 = sbr.rel (0) target = $region17
  $region16: #{yolov1_small_qat_forward.1} parent=0 // pred_region
    _
  $region17: #{yolov1_small_qat_forward.1} parent=0 // pred_fallthru
    _
  // Predicated region
  $region18: #{yolov1_small_qat_forward.1} parent=0 // pred_check
    _
  $region19: #{yolov1_small_qat_forward.1} parent=0 // pred_check_branch
    %23 = sbr.rel (0) target = $region21
  $region20: #{yolov1_small_qat_forward.1} parent=0 // pred_region
    _
  $region21: #{yolov1_small_qat_forward.1} parent=0 // pred_fallthru
    _
  // Predicated region
  $region22: #{yolov1_small_qat_forward.1} parent=0 // pred_check
    _
  $region23: #{yolov1_small_qat_forward.1} parent=0 // pred_check_branch
    %25 = sbr.rel (0) target = $region25
  $region24: #{yolov1_small_qat_forward.1} parent=0 // pred_region
    _
  $region25: #{yolov1_small_qat_forward.1} parent=0 // pred_fallthru
    _
  // Predicated region
  $region26: #{yolov1_small_qat_forward.1} parent=0 // pred_check
    _
  $region27: #{yolov1_small_qat_forward.1} parent=0 // pred_check_branch
    %27 = sbr.rel (0) target = $region29
  $region28: #{yolov1_small_qat_forward.1} parent=0 // pred_region
    _
  $region29: #{yolov1_small_qat_forward.1} parent=0 // pred_fallthru
    _
  // Predicated region
  $region30: #{yolov1_small_qat_forward.1} parent=0 // pred_check
    _
  $region31: #{yolov1_small_qat_forward.1} parent=0 // pred_check_branch
    %29 = sbr.rel (0) target = $region33
  $region32: #{yolov1_small_qat_forward.1} parent=0 // pred_region
    _
  $region33: #{yolov1_small_qat_forward.1} parent=0 // pred_fallthru
    _
  // Predicated region
  $region34: #{yolov1_small_qat_forward.1} parent=0 // pred_check
    _
  $region35: #{yolov1_small_qat_forward.1} parent=0 // pred_check_branch
    %31 = sbr.rel (0) target = $region37
  $region36: #{yolov1_small_qat_forward.1} parent=0 // pred_region
    _
  $region37: #{yolov1_small_qat_forward.1} parent=0 // pred_fallthru
    _
  %vm32 = vcmask 588800
  %33 = vst.msk [vmem:[#allocation2] sm:$0xff] %vm32, 0.0
  %34 = vst.msk [vmem:[#allocation2 + $0x8] sm:$0xff] %vm32, 0.0
  %vm35 = vcmask 582656
  %36 = vst.msk [vmem:[#allocation2 + $0x10] sm:$0x3] %vm35, 0.0
  %37 = vst.msk [vmem:[#allocation2 + $0x18] sm:$0xff] %vm32, 0.0
  %38 = vst.msk [vmem:[#allocation2 + $0x20] sm:$0xff] %vm32, 0.0
  %39 = vst.msk [vmem:[#allocation2 + $0x28] sm:$0x3] %vm35, 0.0
  %v40 = vld [vmem:[%s0] sm:$0xff]
  %v41 = vld [vmem:[%s0 + $0x8] sm:$0xff]
  %v42 = vld [vmem:[%s0 + $0x40] sm:$0xff]
  %v43 = vld [vmem:[%s0 + $0x48] sm:$0xff]
  %48 = vrot.lane.b32.xlu0 %v40, 1
  %v49 = vpop.permute.xlu0 %48
  %50 = vrot.lane.b32.xlu0 %v41, 1
  %v51 = vpop.permute.xlu0 %50
  %52 = vrot.lane.b32.xlu0 %v42, 1
  %v53 = vpop.permute.xlu0 %52
  %54 = vrot.lane.b32.xlu0 %v43, 1
  %v55 = vpop.permute.xlu0 %54
  %vm60 = vcmask 138248
  %61 = vst.msk [vmem:[#allocation2 + $0x1] sm:$0xff] %vm60, %v49
  %62 = vst.msk [vmem:[#allocation2 + $0x9] sm:$0xff] %vm60, %v51
  %63 = vst.msk [vmem:[#allocation2 + $0x19] sm:$0xff] %vm60, %v53
  %64 = vst.msk [vmem:[#allocation2 + $0x21] sm:$0xff] %vm60, %v55
  %s65 = scalar_lea.vmem %s0, 16
  %v66 = vld [vmem:[%s65] sm:$0xff]
  %v67 = vld [vmem:[%s65 + $0x8] sm:$0xff]
  %v68 = vld [vmem:[%s65 + $0x40] sm:$0xff]
  %v69 = vld [vmem:[%s65 + $0x48] sm:$0xff]
  %74 = vrot.lane.b32.xlu0 %v66, 19
  %v75 = vpop.permute.xlu0 %74
  %76 = vrot.lane.b32.xlu0 %v67, 19
  %v77 = vpop.permute.xlu0 %76
  %78 = vrot.lane.b32.xlu0 %v68, 19
  %v79 = vpop.permute.xlu0 %78
  %80 = vrot.lane.b32.xlu0 %v69, 19
  %v81 = vpop.permute.xlu0 %80
  %vm86 = vcmask 285848
  %87 = vst.msk [vmem:[#allocation2 + $0x1] sm:$0xff] %vm86, %v75
  %88 = vst.msk [vmem:[#allocation2 + $0x9] sm:$0xff] %vm86, %v77
  %89 = vst.msk [vmem:[#allocation2 + $0x19] sm:$0xff] %vm86, %v79
  %90 = vst.msk [vmem:[#allocation2 + $0x21] sm:$0xff] %vm86, %v81
  %s91 = scalar_lea.vmem %s0, 32
  %v92 = vld [vmem:[%s91] sm:$0xff]
  %v93 = vld [vmem:[%s91 + $0x8] sm:$0xff]
  %v94 = vld [vmem:[%s91 + $0x40] sm:$0xff]
  %v95 = vld [vmem:[%s91 + $0x48] sm:$0xff]
  %100 = vrot.lane.b32.xlu0 %v92, 37
  %v101 = vpop.permute.xlu0 %100
  %102 = vrot.lane.b32.xlu0 %v93, 37
  %v103 = vpop.permute.xlu0 %102
  %104 = vrot.lane.b32.xlu0 %v94, 37
  %v105 = vpop.permute.xlu0 %104
  %106 = vrot.lane.b32.xlu0 %v95, 37
  %v107 = vpop.permute.xlu0 %106
  %vm112 = vcmask 433448
  %113 = vst.msk [vmem:[#allocation2 + $0x1] sm:$0xff] %vm112, %v101
  %114 = vst.msk [vmem:[#allocation2 + $0x9] sm:$0xff] %vm112, %v103
  %115 = vst.msk [vmem:[#allocation2 + $0x19] sm:$0xff] %vm112, %v105
  %116 = vst.msk [vmem:[#allocation2 + $0x21] sm:$0xff] %vm112, %v107
  %s117 = scalar_lea.vmem %s0, 48
  %v118 = vld [vmem:[%s117] sm:$0xff]
  %v119 = vld [vmem:[%s117 + $0x8] sm:$0xff]
  %v120 = vld [vmem:[%s117 + $0x40] sm:$0xff]
  %v121 = vld [vmem:[%s117 + $0x48] sm:$0xff]
  %126 = vrot.lane.b32.xlu0 %v118, 55
  %v127 = vpop.permute.xlu0 %126
  %128 = vrot.lane.b32.xlu0 %v119, 55
  %v129 = vpop.permute.xlu0 %128
  %130 = vrot.lane.b32.xlu0 %v120, 55
  %v131 = vpop.permute.xlu0 %130
  %132 = vrot.lane.b32.xlu0 %v121, 55
  %v133 = vpop.permute.xlu0 %132
  %vm138 = vcmask 581048
  %139 = vst.msk [vmem:[#allocation2 + $0x1] sm:$0xff] %vm138, %v127
  %140 = vst.msk [vmem:[#allocation2 + $0x9] sm:$0xff] %vm138, %v129
  %141 = vst.msk [vmem:[#allocation2 + $0x19] sm:$0xff] %vm138, %v131
  %142 = vst.msk [vmem:[#allocation2 + $0x21] sm:$0xff] %vm138, %v133
  %v143 = vld [vmem:[#allocation2] sm:$0xff]
  %v144 = vld [vmem:[#allocation2 + $0x8] sm:$0xff]
  %v145 = vld [vmem:[#allocation2 + $0x18] sm:$0xff]
  %v146 = vld [vmem:[#allocation2 + $0x20] sm:$0xff]
  %147 = vst.msk [vmem:[#allocation3] sm:$0xff] %vm32, %v143
  %148 = vst.msk [vmem:[#allocation3 + $0x10] sm:$0xff] %vm32, %v144
  %149 = vst.msk [vmem:[#allocation3 + $0x20] sm:$0xff] %vm32, %v145
  %150 = vst.msk [vmem:[#allocation3 + $0x30] sm:$0xff] %vm32, %v146
  %v151 = vld [vmem:[#allocation2 + $0x1] sm:$0xff]
  %v152 = vld [vmem:[#allocation2 + $0x9] sm:$0xff]
  %v153 = vld [vmem:[#allocation2 + $0x19] sm:$0xff]
  %v154 = vld [vmem:[#allocation2 + $0x21] sm:$0xff]
  %159 = vrot.lane.b32.xlu0 %v151, 72
  %v160 = vpop.permute.xlu0 %159
  %161 = vrot.lane.b32.xlu0 %v152, 72
  %v162 = vpop.permute.xlu0 %161
  %163 = vrot.lane.b32.xlu0 %v153, 72
  %v164 = vpop.permute.xlu0 %163
  %165 = vrot.lane.b32.xlu0 %v154, 72
  %v166 = vpop.permute.xlu0 %165
  %vm171 = vcmask 1048128
  %172 = vst.msk [vmem:[#allocation3] sm:$0xff] %vm171, %v160
  %vm173 = vcmask 130048
  %174 = vst.msk [vmem:[#allocation3 + $0x8] sm:$0xff] %vm173, %v160
  %175 = vst.msk [vmem:[#allocation3 + $0x10] sm:$0xff] %vm171, %v162
  %176 = vst.msk [vmem:[#allocation3 + $0x18] sm:$0xff] %vm173, %v162
  %177 = vst.msk [vmem:[#allocation3 + $0x20] sm:$0xff] %vm171, %v164
  %178 = vst.msk [vmem:[#allocation3 + $0x28] sm:$0xff] %vm173, %v164
  %179 = vst.msk [vmem:[#allocation3 + $0x30] sm:$0xff] %vm171, %v166
  %180 = vst.msk [vmem:[#allocation3 + $0x38] sm:$0xff] %vm173, %v166
  %v181 = vld [vmem:[#allocation2 + $0x2] sm:$0xff]
  %v182 = vld [vmem:[#allocation2 + $0xa] sm:$0xff]
  %v183 = vld [vmem:[#allocation2 + $0x1a] sm:$0xff]
  %v184 = vld [vmem:[#allocation2 + $0x22] sm:$0xff]
  %189 = vrot.lane.b32.xlu0 %v181, 16
  %v190 = vpop.permute.xlu0 %189
  %191 = vrot.lane.b32.xlu0 %v182, 16
  %v192 = vpop.permute.xlu0 %191
  %193 = vrot.lane.b32.xlu0 %v183, 16
  %v194 = vpop.permute.xlu0 %193
  %195 = vrot.lane.b32.xlu0 %v184, 16
  %v196 = vpop.permute.xlu0 %195
  %vm201 = vcmask 720000
  %202 = vst.msk [vmem:[#allocation3 + $0x8] sm:$0xff] %vm201, %v190
  %203 = vst.msk [vmem:[#allocation3 + $0x18] sm:$0xff] %vm201, %v192
  %204 = vst.msk [vmem:[#allocation3 + $0x28] sm:$0xff] %vm201, %v194
  %205 = vst.msk [vmem:[#allocation3 + $0x38] sm:$0xff] %vm201, %v196
  %v206 = vld [vmem:[#allocation3] sm:$0xff]
  %v207 = vld [vmem:[#allocation3 + $0x8] sm:$0xff]
  %v208 = vld [vmem:[#allocation3 + $0x10] sm:$0xff]
  %v209 = vld [vmem:[#allocation3 + $0x18] sm:$0xff]
  %v210 = vld [vmem:[#allocation3 + $0x20] sm:$0xff]
  %v211 = vld [vmem:[#allocation3 + $0x28] sm:$0xff]
  %v212 = vld [vmem:[#allocation3 + $0x30] sm:$0xff]
  %v213 = vld [vmem:[#allocation3 + $0x38] sm:$0xff]
  %v214 = vld [vmem:[%s1] sm:$0xff]
  %v215 = vld [vmem:[%s1 + $0x8] sm:$0xff]
  %v216 = vld [vmem:[%s1 + $0x10] sm:$0xff]
  %v217 = vld [vmem:[%s1 + $0x18] sm:$0xff]
  %v218 = vld [vmem:[%s1 + $0x20] sm:$0xff]
  %v219 = vld [vmem:[%s1 + $0x28] sm:$0xff]
  %v220 = vld [vmem:[%s1 + $0x30] sm:$0xff]
  %v221 = vld [vmem:[%s1 + $0x38] sm:$0xff]
  %v222 = vld [vmem:[%s1 + $0x40] sm:$0xff]
  %v223 = vld [vmem:[%s1 + $0x48] sm:$0xff]
  %v224 = vld [vmem:[%s1 + $0x50] sm:$0xff]
  %v225 = vld [vmem:[%s1 + $0x58] sm:$0xff]
  %v226 = vld [vmem:[%s1 + $0x60] sm:$0xff]
  %v227 = vld [vmem:[%s1 + $0x68] sm:$0xff]
  %v228 = vld [vmem:[%s1 + $0x70] sm:$0xff]
  %v229 = vld [vmem:[%s1 + $0x78] sm:$0xff]
  %v230 = vld [vmem:[%s1 + $0x80] sm:$0xff]
  %v231 = vld [vmem:[%s1 + $0x88] sm:$0xff]
  %v232 = vld [vmem:[%s1 + $0x90] sm:$0xff]
  %v233 = vld [vmem:[%s1 + $0x98] sm:$0xff]
  %v234 = vld [vmem:[%s1 + $0xa0] sm:$0xff]
  %v235 = vld [vmem:[%s1 + $0xa8] sm:$0xff]
  %v236 = vld [vmem:[%s1 + $0xb0] sm:$0xff]
  %v237 = vld [vmem:[%s1 + $0xb8] sm:$0xff]
  %v238 = vld [vmem:[%s1 + $0xc0] sm:$0xff]
  %v239 = vld [vmem:[%s1 + $0xc8] sm:$0xff]
  %v240 = vld [vmem:[%s1 + $0xd0] sm:$0xff]
  %v241 = vld [vmem:[%s2] sm:$0xff]
  %v242 = vld [vmem:[%s2 + $0x8] sm:$0xff]
  %v243 = vld [vmem:[%s2 + $0x10] sm:$0xff]
  %v244 = vld [vmem:[%s2 + $0x18] sm:$0xff]
  %v245 = vld [vmem:[%s2 + $0x20] sm:$0xff]
  %v246 = vld [vmem:[%s2 + $0x28] sm:$0xff]
  %v247 = vld [vmem:[%s2 + $0x30] sm:$0xff]
  %v248 = vld [vmem:[%s2 + $0x38] sm:$0xff]
  %v249 = vld [vmem:[%s2 + $0x40] sm:$0xff]
  %v250 = vld [vmem:[%s2 + $0x48] sm:$0xff]
  %v251 = vld [vmem:[%s2 + $0x50] sm:$0xff]
  %v252 = vld [vmem:[%s2 + $0x58] sm:$0xff]
  %v253 = vld [vmem:[%s2 + $0x60] sm:$0xff]
  %v254 = vld [vmem:[%s2 + $0x68] sm:$0xff]
  %v255 = vld [vmem:[%s2 + $0x70] sm:$0xff]
  %v256 = vld [vmem:[%s2 + $0x78] sm:$0xff]
  %v257 = vld [vmem:[%s2 + $0x80] sm:$0xff]
  %v258 = vld [vmem:[%s2 + $0x88] sm:$0xff]
  %v259 = vld [vmem:[%s2 + $0x90] sm:$0xff]
  %v260 = vld [vmem:[%s2 + $0x98] sm:$0xff]
  %v261 = vld [vmem:[%s2 + $0xa0] sm:$0xff]
  %v262 = vld [vmem:[%s2 + $0xa8] sm:$0xff]
  %v263 = vld [vmem:[%s2 + $0xb0] sm:$0xff]
  %v264 = vld [vmem:[%s2 + $0xb8] sm:$0xff]
  %v265 = vld [vmem:[%s2 + $0xc0] sm:$0xff]
  %v266 = vld [vmem:[%s2 + $0xc8] sm:$0xff]
  %v267 = vld [vmem:[%s2 + $0xd0] sm:$0xff]
  %v268 = vld [vmem:[%s3] sm:$0x1]
  %v270 = vlaneseq
  %v271 = vshrl.u32 %v270, 7
  %v272 = vsub.s32 0, %v271
  %v273 = vrot.slane %v268, %v272
  %vm275 = vcmask 719872
  %v277 = vsel %vm275, %v207, 0
  %v280 = vsel %vm275, %v209, 0
  %v283 = vsel %vm275, %v211, 0
  %v286 = vsel %vm275, %v213, 0
  %288 = vmatprep.subr.mxu0 0.0
  %289 = vmatpush1.msra.mxu0 %v214
  %290 = vmatprep.subr.mxu0 0.0
  %291 = vmatpush1.msra.mxu0 %v215
  %292 = vmatprep.subr.mxu0 0.0
  %293 = vmatpush1.msra.mxu0 %v216
  %294 = vmatprep.subr.mxu0 0.0
  %295 = vmatpush1.msra.mxu0 %v217
  %296 = vmatprep.subr.mxu0 0.0
  %297 = vmatpush1.msra.mxu0 %v218
  %298 = vmatprep.subr.mxu0 0.0
  %299 = vmatpush1.msra.mxu0 %v219
  %300 = vmatprep.subr.mxu0 0.0
  %301 = vmatpush1.msra.mxu0 %v220
  %302 = vmatprep.subr.mxu0 0.0
  %303 = vmatpush1.msra.mxu0 %v221
  %304 = vmatprep.subr.mxu0 0.0
  %305 = vmatpush1.msra.mxu0 %v222
  %306 = vmatprep.subr.mxu0 0.0
  %307 = vmatpush1.msra.mxu0 %v223
  %308 = vmatprep.subr.mxu0 0.0
  %309 = vmatpush1.msra.mxu0 %v224
  %310 = vmatprep.subr.mxu0 0.0
  %311 = vmatpush1.msra.mxu0 %v225
  %312 = vmatprep.subr.mxu0 0.0
  %313 = vmatpush1.msra.mxu0 %v226
  %314 = vmatprep.subr.mxu0 0.0
  %315 = vmatpush1.msra.mxu0 %v227
  %316 = vmatprep.subr.mxu0 0.0
  %317 = vmatpush1.msra.mxu0 %v228
  %318 = vmatprep.subr.mxu0 0.0
  %319 = vmatpush1.msra.mxu0 %v229
  %320 = vmatprep.subr.mxu0 0.0
  %321 = vmatpush1.msra.mxu0 %v230
  %322 = vmatprep.subr.mxu0 0.0
  %323 = vmatpush1.msra.mxu0 %v231
  %324 = vmatprep.subr.mxu0 0.0
  %325 = vmatpush1.msra.mxu0 %v232
  %326 = vmatprep.subr.mxu0 0.0
  %327 = vmatpush1.msra.mxu0 %v233
  %328 = vmatprep.subr.mxu0 0.0
  %329 = vmatpush1.msra.mxu0 %v234
  %330 = vmatprep.subr.mxu0 0.0
  %331 = vmatpush1.msra.mxu0 %v235
  %332 = vmatprep.subr.mxu0 0.0
  %333 = vmatpush1.msra.mxu0 %v236
  %334 = vmatprep.subr.mxu0 0.0
  %335 = vmatpush1.msra.mxu0 %v237
  %336 = vmatprep.subr.mxu0 0.0
  %337 = vmatpush1.msra.mxu0 %v238
  %338 = vmatprep.subr.mxu0 0.0
  %339 = vmatpush1.msra.mxu0 %v239
  %340 = vmatprep.subr.mxu0 0.0
  %341 = vmatpush1.msra.mxu0 %v240
  %342 = vmatprep.subr.mxu0 0.0
  %343 = vmatpush1.msra.mxu0 0.0
  %344 = vmatprep.subr.mxu0 0.0
  %345 = vmatpush1.msra.mxu0 0.0
  %346 = vmatprep.subr.mxu0 0.0
  %347 = vmatpush1.msra.mxu0 0.0
  %348 = vmatprep.subr.mxu0 0.0
  %349 = vmatpush1.msra.mxu0 0.0
  %350 = vmatprep.subr.mxu0 0.0
  %351 = vmatpush1.msra.mxu0 0.0
  %352 = vmatprep.mubr.f32.mxu0 %v277
  %353 = vmatmul.mubr.f32.gmra.mrb[0].mxu0 %v206
  %v354 = vpop.f32.mrb[0].mxu0
  %v355 = vadd.f32 %v273, %v354
  %v356 = vpop.f32.mrb[0].mxu0
  %357 = vmatprep.mubr.f32.mxu0 %v280
  %358 = vmatmul.mubr.f32.gmra.mrb[0].mxu0 %v208
  %v359 = vpop.f32.mrb[0].mxu0
  %v360 = vadd.f32 %v273, %v359
  %v361 = vpop.f32.mrb[0].mxu0
  %362 = vmatprep.mubr.f32.mxu0 %v283
  %363 = vmatmul.mubr.f32.gmra.mrb[0].mxu0 %v210
  %v364 = vpop.f32.mrb[0].mxu0
  %v365 = vadd.f32 %v273, %v364
  %v366 = vpop.f32.mrb[0].mxu0
  %367 = vmatprep.mubr.f32.mxu0 %v286
  %368 = vmatmul.mubr.f32.gmra.mrb[0].mxu0 %v212
  %v369 = vpop.f32.mrb[0].mxu0
  %v370 = vadd.f32 %v273, %v369
  %v371 = vpop.f32.mrb[0].mxu0
  %372 = vdwg.mxu0
  %v373 = vmul.f32 %v355, 0.1
  %v374 = vmul.f32 %v360, 0.1
  %v375 = vmul.f32 %v365, 0.1
  %v376 = vmul.f32 %v370, 0.1
  %v377 = vmax.f32 %v355, %v373
  %v378 = vmax.f32 %v360, %v374
  %v379 = vmax.f32 %v365, %v375
  %v380 = vmax.f32 %v370, %v376
  %381 = vmatprep.subr.mxu0 0.0
  %382 = vmatpush1.msra.mxu0 %v241
  %383 = vmatprep.subr.mxu0 0.0
  %384 = vmatpush1.msra.mxu0 %v242
  %385 = vmatprep.subr.mxu0 0.0
  %386 = vmatpush1.msra.mxu0 %v243
  %387 = vmatprep.subr.mxu0 0.0
  %388 = vmatpush1.msra.mxu0 %v244
  %389 = vmatprep.subr.mxu0 0.0
  %390 = vmatpush1.msra.mxu0 %v245
  %391 = vmatprep.subr.mxu0 0.0
  %392 = vmatpush1.msra.mxu0 %v246
  %393 = vmatprep.subr.mxu0 0.0
  %394 = vmatpush1.msra.mxu0 %v247
  %395 = vmatprep.subr.mxu0 0.0
  %396 = vmatpush1.msra.mxu0 %v248
  %397 = vmatprep.subr.mxu0 0.0
  %398 = vmatpush1.msra.mxu0 %v249
  %399 = vmatprep.subr.mxu0 0.0
  %400 = vmatpush1.msra.mxu0 %v250
  %401 = vmatprep.subr.mxu0 0.0
  %402 = vmatpush1.msra.mxu0 %v251
  %403 = vmatprep.subr.mxu0 0.0
  %404 = vmatpush1.msra.mxu0 %v252
  %405 = vmatprep.subr.mxu0 0.0
  %406 = vmatpush1.msra.mxu0 %v253
  %407 = vmatprep.subr.mxu0 0.0
  %408 = vmatpush1.msra.mxu0 %v254
  %409 = vmatprep.subr.mxu0 0.0
  %410 = vmatpush1.msra.mxu0 %v255
  %411 = vmatprep.subr.mxu0 0.0
  %412 = vmatpush1.msra.mxu0 %v256
  %413 = vmatprep.subr.mxu0 0.0
  %414 = vmatpush1.msra.mxu0 %v257
  %415 = vmatprep.subr.mxu0 0.0
  %416 = vmatpush1.msra.mxu0 %v258
  %417 = vmatprep.subr.mxu0 0.0
  %418 = vmatpush1.msra.mxu0 %v259
  %419 = vmatprep.subr.mxu0 0.0
  %420 = vmatpush1.msra.mxu0 %v260
  %421 = vmatprep.subr.mxu0 0.0
  %422 = vmatpush1.msra.mxu0 %v261
  %423 = vmatprep.subr.mxu0 0.0
  %424 = vmatpush1.msra.mxu0 %v262
  %425 = vmatprep.subr.mxu0 0.0
  %426 = vmatpush1.msra.mxu0 %v263
  %427 = vmatprep.subr.mxu0 0.0
  %428 = vmatpush1.msra.mxu0 %v264
  %429 = vmatprep.subr.mxu0 0.0
  %430 = vmatpush1.msra.mxu0 %v265
  %431 = vmatprep.subr.mxu0 0.0
  %432 = vmatpush1.msra.mxu0 %v266
  %433 = vmatprep.subr.mxu0 0.0
  %434 = vmatpush1.msra.mxu0 %v267
  %435 = vmatprep.subr.mxu0 0.0
  %436 = vmatpush1.msra.mxu0 0.0
  %437 = vmatprep.subr.mxu0 0.0
  %438 = vmatpush1.msra.mxu0 0.0
  %439 = vmatprep.subr.mxu0 0.0
  %440 = vmatpush1.msra.mxu0 0.0
  %441 = vmatprep.subr.mxu0 0.0
  %442 = vmatpush1.msra.mxu0 0.0
  %443 = vmatprep.subr.mxu0 0.0
  %444 = vmatpush1.msra.mxu0 0.0
  %445 = vmatprep.mubr.f32.mxu0 %v277
  %446 = vmatmul.mubr.f32.gmra.mrb[0].mxu0 %v206
  %v447 = vpop.f32.mrb[0].mxu0
  %v448 = vadd.f32 %v273, %v447
  %v449 = vpop.f32.mrb[0].mxu0
  %450 = vmatprep.mubr.f32.mxu0 %v280
  %451 = vmatmul.mubr.f32.gmra.mrb[0].mxu0 %v208
  %v452 = vpop.f32.mrb[0].mxu0
  %v453 = vadd.f32 %v273, %v452
  %v454 = vpop.f32.mrb[0].mxu0
  %455 = vmatprep.mubr.f32.mxu0 %v283
  %456 = vmatmul.mubr.f32.gmra.mrb[0].mxu0 %v210
  %v457 = vpop.f32.mrb[0].mxu0
  %v458 = vadd.f32 %v273, %v457
  %v459 = vpop.f32.mrb[0].mxu0
  %460 = vmatprep.mubr.f32.mxu0 %v286
  %461 = vmatmul.mubr.f32.gmra.mrb[0].mxu0 %v212
  %v462 = vpop.f32.mrb[0].mxu0
  %v463 = vadd.f32 %v273, %v462
  %v464 = vpop.f32.mrb[0].mxu0
  %465 = vdwg.mxu0
  %v466 = vmul.f32 %v448, 0.1
  %v467 = vmul.f32 %v453, 0.1
  %v468 = vmul.f32 %v458, 0.1
  %v469 = vmul.f32 %v463, 0.1
  %v470 = vmax.f32 %v448, %v466
  %v471 = vmax.f32 %v453, %v467
  %v472 = vmax.f32 %v458, %v468
  %v473 = vmax.f32 %v463, %v469
  %v474 = vmax.f32 %v377, %v470
  %v475 = vmax.f32 %v378, %v471
  %v476 = vmax.f32 %v379, %v472
  %v477 = vmax.f32 %v380, %v473
  %vm478 = vcmask 523264
  %479 = vst.msk [vmem:[#allocation4] sm:$0xff] %vm478, %v474
  %480 = vst.msk [vmem:[#allocation4 + $0x8] sm:$0xff] %vm478, %v475
  %481 = vst.msk [vmem:[#allocation4 + $0x10] sm:$0xff] %vm478, %v476
  %482 = vst.msk [vmem:[#allocation4 + $0x18] sm:$0xff] %vm478, %v477
  %vm483 = vcmask 654336
  %484 = vst.msk [vmem:[#allocation5] sm:$0xff] %vm483, 0.0
  %vm485 = vcmask 648192
  %486 = vst.msk [vmem:[#allocation5 + $0x8] sm:$0x3] %vm485, 0.0
  %487 = vst.msk [vmem:[#allocation5 + $0x10] sm:$0xff] %vm483, 0.0
  %488 = vst.msk [vmem:[#allocation5 + $0x18] sm:$0x3] %vm485, 0.0
  %v489 = vld [vmem:[#allocation4] ss:$2 sm:$0xff]
  %s490 = scalar_lea.vmem [#allocation4], 16
  %v491 = vld [vmem:[%s490] ss:$2 sm:$0xff]
  %s492 = scalar_lea.vmem [#allocation4], 1
  %v493 = vld [vmem:[%s492] ss:$2 sm:$0xff]
  %s494 = scalar_lea.vmem [#allocation4], 17
  %v495 = vld [vmem:[%s494] ss:$2 sm:$0xff]
  %v496 = vmax.f32 %v489, %v493
  %v497 = vmax.f32 %v491, %v495
  %500 = vrot.lane.b32.xlu0 %v496, 8
  %v501 = vpop.permute.xlu0 %500
  %502 = vrot.lane.b32.xlu0 %v497, 8
  %v503 = vpop.permute.xlu0 %502
  %vm506 = vcmask 588864
  %507 = vst.msk [vmem:[#allocation5 + $0x1] sm:$0xff] %vm506, %v501
  %508 = vst.msk [vmem:[#allocation5 + $0x11] sm:$0xff] %vm506, %v503
  %v509 = vld [vmem:[#allocation5] sm:$0xff]
  %v510 = vld [vmem:[#allocation5 + $0x10] sm:$0xff]
  %511 = vst.msk [vmem:[#allocation6] sm:$0xff] %vm483, %v509
  %512 = vst.msk [vmem:[#allocation6 + $0x10] sm:$0xff] %vm483, %v510
  %v513 = vld [vmem:[#allocation5 + $0x1] sm:$0xff]
  %v514 = vld [vmem:[#allocation5 + $0x11] sm:$0xff]
  %517 = vrot.lane.b32.xlu0 %v513, 80
  %v518 = vpop.permute.xlu0 %517
  %519 = vrot.lane.b32.xlu0 %v514, 80
  %v520 = vpop.permute.xlu0 %519
  %vm523 = vcmask 1048192
  %524 = vst.msk [vmem:[#allocation6] sm:$0xff] %vm523, %v518
  %vm525 = vcmask 261120
  %526 = vst.msk [vmem:[#allocation6 + $0x8] sm:$0xff] %vm525, %v518
  %527 = vst.msk [vmem:[#allocation6 + $0x10] sm:$0xff] %vm523, %v520
  %528 = vst.msk [vmem:[#allocation6 + $0x18] sm:$0xff] %vm525, %v520
  %v529 = vld [vmem:[#allocation5 + $0x2] sm:$0xff]
  %v530 = vld [vmem:[#allocation5 + $0x12] sm:$0xff]
  %533 = vrot.lane.b32.xlu0 %v529, 32
  %v534 = vpop.permute.xlu0 %533
  %535 = vrot.lane.b32.xlu0 %v530, 32
  %v536 = vpop.permute.xlu0 %535
  %vm539 = vcmask 916736
  %540 = vst.msk [vmem:[#allocation6 + $0x8] sm:$0xff] %vm539, %v534
  %541 = vst.msk [vmem:[#allocation6 + $0x18] sm:$0xff] %vm539, %v536
  %v542 = vld [vmem:[#allocation6] sm:$0xff]
  %v543 = vld [vmem:[#allocation6 + $0x8] sm:$0xff]
  %v544 = vld [vmem:[#allocation6 + $0x10] sm:$0xff]
  %v545 = vld [vmem:[#allocation6 + $0x18] sm:$0xff]
  %v546 = vld [vmem:[%s4] sm:$0xff]
  %v547 = vld [vmem:[%s4 + $0x8] sm:$0xff]
  %v548 = vld [vmem:[%s4 + $0x10] sm:$0xff]
  %v549 = vld [vmem:[%s4 + $0x18] sm:$0xff]
  %v550 = vld [vmem:[%s4 + $0x20] sm:$0xff]
  %v551 = vld [vmem:[%s4 + $0x28] sm:$0xff]
  %v552 = vld [vmem:[%s4 + $0x30] sm:$0xff]
  %v553 = vld [vmem:[%s4 + $0x38] sm:$0xff]
  %v554 = vld [vmem:[%s4 + $0x40] sm:$0xff]
  %v555 = vld [vmem:[%s4 + $0x48] sm:$0xff]
  %v556 = vld [vmem:[%s4 + $0x50] sm:$0xff]
  %v557 = vld [vmem:[%s4 + $0x58] sm:$0xff]
  %v558 = vld [vmem:[%s4 + $0x60] sm:$0xff]
  %v559 = vld [vmem:[%s4 + $0x68] sm:$0xff]
  %v560 = vld [vmem:[%s4 + $0x70] sm:$0xff]
  %v561 = vld [vmem:[%s4 + $0x78] sm:$0xff]
  %v562 = vld [vmem:[%s4 + $0x80] sm:$0xff]
  %v563 = vld [vmem:[%s4 + $0x88] sm:$0xff]
  %v564 = vld [vmem:[%s4 + $0x90] sm:$0xff]
  %v565 = vld [vmem:[%s4 + $0x98] sm:$0xff]
  %v566 = vld [vmem:[%s4 + $0xa0] sm:$0xff]
  %v567 = vld [vmem:[%s4 + $0xa8] sm:$0xff]
  %v568 = vld [vmem:[%s4 + $0xb0] sm:$0xff]
  %v569 = vld [vmem:[%s4 + $0xb8] sm:$0xff]
  %v570 = vld [vmem:[%s4 + $0xc0] sm:$0xff]
  %v571 = vld [vmem:[%s4 + $0xc8] sm:$0xff]
  %v572 = vld [vmem:[%s4 + $0xd0] sm:$0xff]
  %v573 = vld [vmem:[%s4 + $0xd8] sm:$0xff]
  %v574 = vld [vmem:[%s4 + $0xe0] sm:$0xff]
  %v575 = vld [vmem:[%s4 + $0xe8] sm:$0xff]
  %v576 = vld [vmem:[%s5] sm:$0xff]
  %v577 = vld [vmem:[%s5 + $0x8] sm:$0xff]
  %v578 = vld [vmem:[%s5 + $0x10] sm:$0xff]
  %v579 = vld [vmem:[%s5 + $0x18] sm:$0xff]
  %v580 = vld [vmem:[%s5 + $0x20] sm:$0xff]
  %v581 = vld [vmem:[%s5 + $0x28] sm:$0xff]
  %v582 = vld [vmem:[%s5 + $0x30] sm:$0xff]
  %v583 = vld [vmem:[%s5 + $0x38] sm:$0xff]
  %v584 = vld [vmem:[%s5 + $0x40] sm:$0xff]
  %v585 = vld [vmem:[%s5 + $0x48] sm:$0xff]
  %v586 = vld [vmem:[%s5 + $0x50] sm:$0xff]
  %v587 = vld [vmem:[%s5 + $0x58] sm:$0xff]
  %v588 = vld [vmem:[%s5 + $0x60] sm:$0xff]
  %v589 = vld [vmem:[%s5 + $0x68] sm:$0xff]
  %v590 = vld [vmem:[%s5 + $0x70] sm:$0xff]
  %v591 = vld [vmem:[%s5 + $0x78] sm:$0xff]
  %v592 = vld [vmem:[%s5 + $0x80] sm:$0xff]
  %v593 = vld [vmem:[%s5 + $0x88] sm:$0xff]
  %v594 = vld [vmem:[%s5 + $0x90] sm:$0xff]
  %v595 = vld [vmem:[%s5 + $0x98] sm:$0xff]
  %v596 = vld [vmem:[%s5 + $0xa0] sm:$0xff]
  %v597 = vld [vmem:[%s5 + $0xa8] sm:$0xff]
  %v598 = vld [vmem:[%s5 + $0xb0] sm:$0xff]
  %v599 = vld [vmem:[%s5 + $0xb8] sm:$0xff]
  %v600 = vld [vmem:[%s5 + $0xc0] sm:$0xff]
  %v601 = vld [vmem:[%s5 + $0xc8] sm:$0xff]
  %v602 = vld [vmem:[%s5 + $0xd0] sm:$0xff]
  %v603 = vld [vmem:[%s5 + $0xd8] sm:$0xff]
  %v604 = vld [vmem:[%s5 + $0xe0] sm:$0xff]
  %v605 = vld [vmem:[%s5 + $0xe8] sm:$0xff]
  %v606 = vld [vmem:[%s6] sm:$0x1]
  %v608 = vlaneseq
  %v609 = vshrl.u32 %v608, 7
  %v610 = vsub.s32 0, %v609
  %v611 = vrot.slane %v606, %v610
  %vm613 = vcmask 916480
  %v615 = vsel %vm613, %v543, 0
  %v618 = vsel %vm613, %v545, 0
  %620 = vmatprep.subr.mxu0 0.0
  %621 = vmatpush1.msra.mxu0 %v546
  %622 = vmatprep.subr.mxu0 0.0
  %623 = vmatpush1.msra.mxu0 %v547
  %624 = vmatprep.subr.mxu0 0.0
  %625 = vmatpush1.msra.mxu0 %v548
  %626 = vmatprep.subr.mxu0 0.0
  %627 = vmatpush1.msra.mxu0 %v549
  %628 = vmatprep.subr.mxu0 0.0
  %629 = vmatpush1.msra.mxu0 %v550
  %630 = vmatprep.subr.mxu0 0.0
  %631 = vmatpush1.msra.mxu0 %v551
  %632 = vmatprep.subr.mxu0 0.0
  %633 = vmatpush1.msra.mxu0 %v552
  %634 = vmatprep.subr.mxu0 0.0
  %635 = vmatpush1.msra.mxu0 %v553
  %636 = vmatprep.subr.mxu0 0.0
  %637 = vmatpush1.msra.mxu0 %v554
  %638 = vmatprep.subr.mxu0 0.0
  %639 = vmatpush1.msra.mxu0 %v555
  %640 = vmatprep.subr.mxu0 0.0
  %641 = vmatpush1.msra.mxu0 %v556
  %642 = vmatprep.subr.mxu0 0.0
  %643 = vmatpush1.msra.mxu0 %v557
  %644 = vmatprep.subr.mxu0 0.0
  %645 = vmatpush1.msra.mxu0 %v558
  %646 = vmatprep.subr.mxu0 0.0
  %647 = vmatpush1.msra.mxu0 %v559
  %648 = vmatprep.subr.mxu0 0.0
  %649 = vmatpush1.msra.mxu0 %v560
  %650 = vmatprep.subr.mxu0 0.0
  %651 = vmatpush1.msra.mxu0 %v561
  %652 = vmatprep.subr.mxu0 0.0
  %653 = vmatpush1.msra.mxu0 %v562
  %654 = vmatprep.subr.mxu0 0.0
  %655 = vmatpush1.msra.mxu0 %v563
  %656 = vmatprep.subr.mxu0 0.0
  %657 = vmatpush1.msra.mxu0 %v564
  %658 = vmatprep.subr.mxu0 0.0
  %659 = vmatpush1.msra.mxu0 %v565
  %660 = vmatprep.subr.mxu0 0.0
  %661 = vmatpush1.msra.mxu0 %v566
  %662 = vmatprep.subr.mxu0 0.0
  %663 = vmatpush1.msra.mxu0 %v567
  %664 = vmatprep.subr.mxu0 0.0
  %665 = vmatpush1.msra.mxu0 %v568
  %666 = vmatprep.subr.mxu0 0.0
  %667 = vmatpush1.msra.mxu0 %v569
  %668 = vmatprep.subr.mxu0 0.0
  %669 = vmatpush1.msra.mxu0 %v570
  %670 = vmatprep.subr.mxu0 0.0
  %671 = vmatpush1.msra.mxu0 %v571
  %672 = vmatprep.subr.mxu0 0.0
  %673 = vmatpush1.msra.mxu0 %v572
  %674 = vmatprep.subr.mxu0 0.0
  %675 = vmatpush1.msra.mxu0 %v573
  %676 = vmatprep.subr.mxu0 0.0
  %677 = vmatpush1.msra.mxu0 %v574
  %678 = vmatprep.subr.mxu0 0.0
  %679 = vmatpush1.msra.mxu0 %v575
  %680 = vmatprep.subr.mxu0 0.0
  %681 = vmatpush1.msra.mxu0 0.0
  %682 = vmatprep.subr.mxu0 0.0
  %683 = vmatpush1.msra.mxu0 0.0
  %684 = vmatprep.mubr.f32.mxu0 %v615
  %685 = vmatmul.mubr.f32.gmra.mrb[0].mxu0 %v542
  %v686 = vpop.f32.mrb[0].mxu0
  %v687 = vadd.f32 %v611, %v686
  %v688 = vpop.f32.mrb[0].mxu0
  %689 = vmatprep.mubr.f32.mxu0 %v618
  %690 = vmatmul.mubr.f32.gmra.mrb[0].mxu0 %v544
  %v691 = vpop.f32.mrb[0].mxu0
  %v692 = vadd.f32 %v611, %v691
  %v693 = vpop.f32.mrb[0].mxu0
  %694 = vdwg.mxu0
  %v695 = vmul.f32 %v687, 0.1
  %v696 = vmul.f32 %v692, 0.1
  %v697 = vmax.f32 %v687, %v695
  %v698 = vmax.f32 %v692, %v696
  %699 = vmatprep.subr.mxu0 0.0
  %700 = vmatpush1.msra.mxu0 %v576
  %701 = vmatprep.subr.mxu0 0.0
  %702 = vmatpush1.msra.mxu0 %v577
  %703 = vmatprep.subr.mxu0 0.0
  %704 = vmatpush1.msra.mxu0 %v578
  %705 = vmatprep.subr.mxu0 0.0
  %706 = vmatpush1.msra.mxu0 %v579
  %707 = vmatprep.subr.mxu0 0.0
  %708 = vmatpush1.msra.mxu0 %v580
  %709 = vmatprep.subr.mxu0 0.0
  %710 = vmatpush1.msra.mxu0 %v581
  %711 = vmatprep.subr.mxu0 0.0
  %712 = vmatpush1.msra.mxu0 %v582
  %713 = vmatprep.subr.mxu0 0.0
  %714 = vmatpush1.msra.mxu0 %v583
  %715 = vmatprep.subr.mxu0 0.0
  %716 = vmatpush1.msra.mxu0 %v584
  %717 = vmatprep.subr.mxu0 0.0
  %718 = vmatpush1.msra.mxu0 %v585
  %719 = vmatprep.subr.mxu0 0.0
  %720 = vmatpush1.msra.mxu0 %v586
  %721 = vmatprep.subr.mxu0 0.0
  %722 = vmatpush1.msra.mxu0 %v587
  %723 = vmatprep.subr.mxu0 0.0
  %724 = vmatpush1.msra.mxu0 %v588
  %725 = vmatprep.subr.mxu0 0.0
  %726 = vmatpush1.msra.mxu0 %v589
  %727 = vmatprep.subr.mxu0 0.0
  %728 = vmatpush1.msra.mxu0 %v590
  %729 = vmatprep.subr.mxu0 0.0
  %730 = vmatpush1.msra.mxu0 %v591
  %731 = vmatprep.subr.mxu0 0.0
  %732 = vmatpush1.msra.mxu0 %v592
  %733 = vmatprep.subr.mxu0 0.0
  %734 = vmatpush1.msra.mxu0 %v593
  %735 = vmatprep.subr.mxu0 0.0
  %736 = vmatpush1.msra.mxu0 %v594
  %737 = vmatprep.subr.mxu0 0.0
  %738 = vmatpush1.msra.mxu0 %v595
  %739 = vmatprep.subr.mxu0 0.0
  %740 = vmatpush1.msra.mxu0 %v596
  %741 = vmatprep.subr.mxu0 0.0
  %742 = vmatpush1.msra.mxu0 %v597
  %743 = vmatprep.subr.mxu0 0.0
  %744 = vmatpush1.msra.mxu0 %v598
  %745 = vmatprep.subr.mxu0 0.0
  %746 = vmatpush1.msra.mxu0 %v599
  %747 = vmatprep.subr.mxu0 0.0
  %748 = vmatpush1.msra.mxu0 %v600
  %749 = vmatprep.subr.mxu0 0.0
  %750 = vmatpush1.msra.mxu0 %v601
  %751 = vmatprep.subr.mxu0 0.0
  %752 = vmatpush1.msra.mxu0 %v602
  %753 = vmatprep.subr.mxu0 0.0
  %754 = vmatpush1.msra.mxu0 %v603
  %755 = vmatprep.subr.mxu0 0.0
  %756 = vmatpush1.msra.mxu0 %v604
  %757 = vmatprep.subr.mxu0 0.0
  %758 = vmatpush1.msra.mxu0 %v605
  %759 = vmatprep.subr.mxu0 0.0
  %760 = vmatpush1.msra.mxu0 0.0
  %761 = vmatprep.subr.mxu0 0.0
  %762 = vmatpush1.msra.mxu0 0.0
  %763 = vmatprep.mubr.f32.mxu0 %v615
  %764 = vmatmul.mubr.f32.gmra.mrb[0].mxu0 %v542
  %v765 = vpop.f32.mrb[0].mxu0
  %v766 = vadd.f32 %v611, %v765
  %v767 = vpop.f32.mrb[0].mxu0
  %768 = vmatprep.mubr.f32.mxu0 %v618
  %769 = vmatmul.mubr.f32.gmra.mrb[0].mxu0 %v544
  %v770 = vpop.f32.mrb[0].mxu0
  %v771 = vadd.f32 %v611, %v770
  %v772 = vpop.f32.mrb[0].mxu0
  %773 = vdwg.mxu0
  %v774 = vmul.f32 %v766, 0.1
  %v775 = vmul.f32 %v771, 0.1
  %v776 = vmax.f32 %v766, %v774
  %v777 = vmax.f32 %v771, %v775
  %v778 = vmax.f32 %v697, %v776
  %v779 = vmax.f32 %v698, %v777
  %780 = vst.msk [vmem:[#allocation7] sm:$0xff] %vm478, %v778
  %781 = vst.msk [vmem:[#allocation7 + $0x8] sm:$0xff] %vm478, %v779
  %v782 = vld [vmem:[#allocation7] sm:$0x1]
  %v783 = vld [vmem:[#allocation7 + $0x8] sm:$0x1]
  %v784 = vld [vmem:[#allocation7 + $0x1] sm:$0x1]
  %v785 = vld [vmem:[#allocation7 + $0x9] sm:$0x1]
  %v786 = vmax.f32 %v782, %v784
  %v787 = vmax.f32 %v783, %v785
  %v791 = vunpack.c.l.s4 1983009808
  %v792 = vunpack.c.0.s8 %v791
  %v793 = vlaneseq
  %v794 = vshrl.u32 %v793, 7
  %v795 = vsub.s32 %v792, %v794
  %v796 = vrot.slane %v786, %v795
  %v798 = vunpack.c.l.s4 1983009808
  %v799 = vunpack.c.0.s8 %v798
  %v800 = vlaneseq
  %v801 = vshrl.u32 %v800, 7
  %v802 = vsub.s32 %v799, %v801
  %v803 = vrot.slane %v787, %v802
  %vm804 = vcmask 1044484
  %v805 = vsel %vm804, %v796, %v796
  %vm806 = vcmask 1046534
  %v807 = vsel %vm806, %v796, %v805
  %v808 = vrot.slane %v803, 7
  %vm809 = vcmask 1041409
  %v810 = vsel %vm809, %v808, %v807
  %vm811 = vcmask 1043459
  %v812 = vsel %vm811, %v808, %v810
  %vm813 = vcmask 1045509
  %v814 = vsel %vm813, %v808, %v812
  %vm815 = vcmask 1047559
  %v816 = vsel %vm815, %v808, %v814
  %vm818 = vcmask 517120
  %819 = vst.msk [vmem:[#allocation8] sm:$0x3] %vm818, %v816
  %v820 = vld [vmem:[#allocation7 + $0x2] sm:$0x1]
  %v821 = vld [vmem:[#allocation7 + $0xa] sm:$0x1]
  %v822 = vld [vmem:[#allocation7 + $0x3] sm:$0x1]
  %v823 = vld [vmem:[#allocation7 + $0xb] sm:$0x1]
  %v824 = vmax.f32 %v820, %v822
  %v825 = vmax.f32 %v821, %v823
  %v829 = vunpack.c.l.s4 1983009808
  %v830 = vunpack.c.0.s8 %v829
  %v831 = vlaneseq
  %v832 = vshrl.u32 %v831, 7
  %v833 = vsub.s32 %v830, %v832
  %v834 = vrot.slane %v824, %v833
  %v836 = vunpack.c.l.s4 1983009808
  %v837 = vunpack.c.0.s8 %v836
  %v838 = vlaneseq
  %v839 = vshrl.u32 %v838, 7
  %v840 = vsub.s32 %v837, %v839
  %v841 = vrot.slane %v825, %v840
  %v842 = vsel %vm804, %v834, %v834
  %v843 = vsel %vm806, %v834, %v842
  %v844 = vrot.slane %v841, 7
  %v845 = vsel %vm809, %v844, %v843
  %v846 = vsel %vm811, %v844, %v845
  %v847 = vsel %vm813, %v844, %v846
  %v848 = vsel %vm815, %v844, %v847
  %849 = vrot.lane.b32.xlu0 %v848, 64
  %v850 = vpop.permute.xlu0 %849
  %vm852 = vcmask 1041920
  %853 = vst.msk [vmem:[#allocation8] sm:$0x3] %vm852, %v850
  %v854 = vld [vmem:[#allocation7 + $0x4] sm:$0x1]
  %v855 = vld [vmem:[#allocation7 + $0xc] sm:$0x1]
  %v856 = vld [vmem:[#allocation7 + $0x5] sm:$0x1]
  %v857 = vld [vmem:[#allocation7 + $0xd] sm:$0x1]
  %v858 = vmax.f32 %v854, %v856
  %v859 = vmax.f32 %v855, %v857
  %v863 = vunpack.c.l.s4 1983009808
  %v864 = vunpack.c.0.s8 %v863
  %v865 = vlaneseq
  %v866 = vshrl.u32 %v865, 7
  %v867 = vsub.s32 %v864, %v866
  %v868 = vrot.slane %v858, %v867
  %v870 = vunpack.c.l.s4 1983009808
  %v871 = vunpack.c.0.s8 %v870
  %v872 = vlaneseq
  %v873 = vshrl.u32 %v872, 7
  %v874 = vsub.s32 %v871, %v873
  %v875 = vrot.slane %v859, %v874
  %v876 = vsel %vm804, %v868, %v868
  %v877 = vsel %vm806, %v868, %v876
  %v878 = vrot.slane %v875, 7
  %v879 = vsel %vm809, %v878, %v877
  %v880 = vsel %vm811, %v878, %v879
  %v881 = vsel %vm813, %v878, %v880
  %v882 = vsel %vm815, %v878, %v881
  %884 = vst.msk [vmem:[#allocation8 + $0x2] sm:$0x3] %vm818, %v882
  %v885 = vld [vmem:[#allocation7 + $0x6] sm:$0x1]
  %v886 = vld [vmem:[#allocation7 + $0xe] sm:$0x1]
  %v887 = vld [vmem:[#allocation7 + $0x7] sm:$0x1]
  %v888 = vld [vmem:[#allocation7 + $0xf] sm:$0x1]
  %v889 = vmax.f32 %v885, %v887
  %v890 = vmax.f32 %v886, %v888
  %v894 = vunpack.c.l.s4 1983009808
  %v895 = vunpack.c.0.s8 %v894
  %v896 = vlaneseq
  %v897 = vshrl.u32 %v896, 7
  %v898 = vsub.s32 %v895, %v897
  %v899 = vrot.slane %v889, %v898
  %v901 = vunpack.c.l.s4 1983009808
  %v902 = vunpack.c.0.s8 %v901
  %v903 = vlaneseq
  %v904 = vshrl.u32 %v903, 7
  %v905 = vsub.s32 %v902, %v904
  %v906 = vrot.slane %v890, %v905
  %v907 = vsel %vm804, %v899, %v899
  %v908 = vsel %vm806, %v899, %v907
  %v909 = vrot.slane %v906, 7
  %v910 = vsel %vm809, %v909, %v908
  %v911 = vsel %vm811, %v909, %v910
  %v912 = vsel %vm813, %v909, %v911
  %v913 = vsel %vm815, %v909, %v912
  %914 = vrot.lane.b32.xlu0 %v913, 64
  %v915 = vpop.permute.xlu0 %914
  %917 = vst.msk [vmem:[#allocation8 + $0x2] sm:$0x3] %vm852, %v915
  %v918 = vld [vmem:[#allocation8] sm:$0xf]
  %v919 = vld [vmem:[%s7] sm:$0xff]
  %v920 = vld [vmem:[%s7 + $0x8] sm:$0xff]
  %v921 = vld [vmem:[%s7 + $0x10] sm:$0xff]
  %v922 = vld [vmem:[%s7 + $0x18] sm:$0xff]
  %v923 = vld [vmem:[%s7 + $0x20] sm:$0xff]
  %v924 = vld [vmem:[%s7 + $0x28] sm:$0xff]
  %v925 = vld [vmem:[%s7 + $0x30] sm:$0xff]
  %v926 = vld [vmem:[%s7 + $0x38] sm:$0xff]
  %v927 = vld [vmem:[%s7 + $0x40] sm:$0xff]
  %v928 = vld [vmem:[%s7 + $0x48] sm:$0xff]
  %v929 = vld [vmem:[%s7 + $0x50] sm:$0xff]
  %v930 = vld [vmem:[%s7 + $0x58] sm:$0xff]
  %v931 = vld [vmem:[%s7 + $0x60] sm:$0xff]
  %v932 = vld [vmem:[%s7 + $0x68] sm:$0xff]
  %v933 = vld [vmem:[%s7 + $0x70] sm:$0xff]
  %v934 = vld [vmem:[%s7 + $0x78] sm:$0xff]
  %v935 = vld [vmem:[%s7 + $0x80] sm:$0xff]
  %v936 = vld [vmem:[%s7 + $0x88] sm:$0xff]
  %v937 = vld [vmem:[%s7 + $0x90] sm:$0xff]
  %v938 = vld [vmem:[%s7 + $0x98] sm:$0xff]
  %v939 = vld [vmem:[%s7 + $0xa0] sm:$0xff]
  %v940 = vld [vmem:[%s7 + $0xa8] sm:$0xff]
  %v941 = vld [vmem:[%s7 + $0xb0] sm:$0xff]
  %v942 = vld [vmem:[%s7 + $0xb8] sm:$0xff]
  %v943 = vld [vmem:[%s7 + $0xc0] sm:$0xff]
  %v944 = vld [vmem:[%s7 + $0xc8] sm:$0xff]
  %v945 = vld [vmem:[%s7 + $0xd0] sm:$0xff]
  %v946 = vld [vmem:[%s7 + $0xd8] sm:$0xff]
  %v947 = vld [vmem:[%s7 + $0xe0] sm:$0xff]
  %v948 = vld [vmem:[%s7 + $0xe8] sm:$0xff]
  %v949 = vld [vmem:[%s7 + $0xf0] sm:$0xff]
  %v950 = vld [vmem:[%s7 + $0xf8] sm:$0xff]
  %v951 = vld [vmem:[%s7 + $0x100] sm:$0xff]
  %v952 = vld [vmem:[%s7 + $0x108] sm:$0xff]
  %v953 = vld [vmem:[%s7 + $0x110] sm:$0xff]
  %v954 = vld [vmem:[%s7 + $0x118] sm:$0xff]
  %v955 = vld [vmem:[%s7 + $0x120] sm:$0xff]
  %v956 = vld [vmem:[%s7 + $0x128] sm:$0xff]
  %v957 = vld [vmem:[%s7 + $0x130] sm:$0xff]
  %v958 = vld [vmem:[%s7 + $0x138] sm:$0xff]
  %v959 = vld [vmem:[%s7 + $0x140] sm:$0xff]
  %v960 = vld [vmem:[%s7 + $0x148] sm:$0xff]
  %v961 = vld [vmem:[%s7 + $0x150] sm:$0xff]
  %v962 = vld [vmem:[%s7 + $0x158] sm:$0xff]
  %v963 = vld [vmem:[%s7 + $0x160] sm:$0xff]
  %v964 = vld [vmem:[%s7 + $0x168] sm:$0xff]
  %v965 = vld [vmem:[%s7 + $0x170] sm:$0xff]
  %v966 = vld [vmem:[%s7 + $0x178] sm:$0xff]
  %v967 = vld [vmem:[%s7 + $0x180] sm:$0xff]
  %v968 = vld [vmem:[%s7 + $0x188] sm:$0xff]
  %v969 = vld [vmem:[%s7 + $0x190] sm:$0xff]
  %v970 = vld [vmem:[%s7 + $0x198] sm:$0xff]
  %v971 = vld [vmem:[%s7 + $0x1a0] sm:$0xff]
  %v972 = vld [vmem:[%s7 + $0x1a8] sm:$0xff]
  %v973 = vld [vmem:[%s7 + $0x1b0] sm:$0xff]
  %v974 = vld [vmem:[%s7 + $0x1b8] sm:$0xff]
  %v975 = vld [vmem:[%s7 + $0x1c0] sm:$0xff]
  %v976 = vld [vmem:[%s7 + $0x1c8] sm:$0xff]
  %v977 = vld [vmem:[%s7 + $0x1d0] sm:$0xff]
  %v978 = vld [vmem:[%s7 + $0x1d8] sm:$0xff]
  %v979 = vld [vmem:[%s7 + $0x1e0] sm:$0xff]
  %v980 = vld [vmem:[%s7 + $0x1e8] sm:$0xff]
  %v981 = vld [vmem:[%s7 + $0x1f0] sm:$0xff]
  %v982 = vld [vmem:[%s7 + $0x1f8] sm:$0xff]
  %v983 = vld [vmem:[%s8] sm:$0x3]
  %v985 = vlaneseq
  %v986 = vshrl.u32 %v985, 7
  %v987 = vsub.s32 0, %v986
  %v988 = vrot.slane %v983, %v987
  %v989 = vlaneseq
  %v990 = vshrl.u32 %v989, 7
  %v991 = vsub.s32 1, %v990
  %v992 = vrot.slane %v983, %v991
  %v997 = vunpack.c.l.s4 1983009808
  %v998 = vunpack.c.0.s8 %v997
  %v999 = vlaneseq
  %v1000 = vshrl.u32 %v999, 7
  %v1001 = vsub.s32 %v998, %v1000
  %v1002 = vrot.slane %v918, %v1001
  %v1003 = vcombine.high %v1002, %v1002
  %1006 = vmatprep.subr.mxu0 %v920
  %1007 = vmatpush1.msra.mxu0 %v919
  %1008 = vmatprep.subr.mxu0 %v922
  %1009 = vmatpush1.msra.mxu0 %v921
  %1010 = vmatprep.subr.mxu0 %v924
  %1011 = vmatpush1.msra.mxu0 %v923
  %1012 = vmatprep.subr.mxu0 %v926
  %1013 = vmatpush1.msra.mxu0 %v925
  %1014 = vmatprep.subr.mxu0 %v928
  %1015 = vmatpush1.msra.mxu0 %v927
  %1016 = vmatprep.subr.mxu0 %v930
  %1017 = vmatpush1.msra.mxu0 %v929
  %1018 = vmatprep.subr.mxu0 %v932
  %1019 = vmatpush1.msra.mxu0 %v931
  %1020 = vmatprep.subr.mxu0 %v934
  %1021 = vmatpush1.msra.mxu0 %v933
  %1022 = vmatprep.subr.mxu0 %v936
  %1023 = vmatpush1.msra.mxu0 %v935
  %1024 = vmatprep.subr.mxu0 %v938
  %1025 = vmatpush1.msra.mxu0 %v937
  %1026 = vmatprep.subr.mxu0 %v940
  %1027 = vmatpush1.msra.mxu0 %v939
  %1028 = vmatprep.subr.mxu0 %v942
  %1029 = vmatpush1.msra.mxu0 %v941
  %1030 = vmatprep.subr.mxu0 %v944
  %1031 = vmatpush1.msra.mxu0 %v943
  %1032 = vmatprep.subr.mxu0 %v946
  %1033 = vmatpush1.msra.mxu0 %v945
  %1034 = vmatprep.subr.mxu0 %v948
  %1035 = vmatpush1.msra.mxu0 %v947
  %1036 = vmatprep.subr.mxu0 %v950
  %1037 = vmatpush1.msra.mxu0 %v949
  %1038 = vmatprep.subr.mxu0 %v952
  %1039 = vmatpush1.msra.mxu0 %v951
  %1040 = vmatprep.subr.mxu0 %v954
  %1041 = vmatpush1.msra.mxu0 %v953
  %1042 = vmatprep.subr.mxu0 %v956
  %1043 = vmatpush1.msra.mxu0 %v955
  %1044 = vmatprep.subr.mxu0 %v958
  %1045 = vmatpush1.msra.mxu0 %v957
  %1046 = vmatprep.subr.mxu0 %v960
  %1047 = vmatpush1.msra.mxu0 %v959
  %1048 = vmatprep.subr.mxu0 %v962
  %1049 = vmatpush1.msra.mxu0 %v961
  %1050 = vmatprep.subr.mxu0 %v964
  %1051 = vmatpush1.msra.mxu0 %v963
  %1052 = vmatprep.subr.mxu0 %v966
  %1053 = vmatpush1.msra.mxu0 %v965
  %1054 = vmatprep.subr.mxu0 %v968
  %1055 = vmatpush1.msra.mxu0 %v967
  %1056 = vmatprep.subr.mxu0 %v970
  %1057 = vmatpush1.msra.mxu0 %v969
  %1058 = vmatprep.subr.mxu0 %v972
  %1059 = vmatpush1.msra.mxu0 %v971
  %1060 = vmatprep.subr.mxu0 %v974
  %1061 = vmatpush1.msra.mxu0 %v973
  %1062 = vmatprep.subr.mxu0 %v976
  %1063 = vmatpush1.msra.mxu0 %v975
  %1064 = vmatprep.subr.mxu0 %v978
  %1065 = vmatpush1.msra.mxu0 %v977
  %1066 = vmatprep.subr.mxu0 %v980
  %1067 = vmatpush1.msra.mxu0 %v979
  %1068 = vmatprep.subr.mxu0 %v982
  %1069 = vmatpush1.msra.mxu0 %v981
  %1070 = vmatprep.mubr.f32.mxu0 %v1003
  %1071 = vmatmul.mubr.f32.gmra.mrb[0].mxu0 %v1002
  %v1072 = vpop.f32.mrb[0].mxu0
  %v1073 = vadd.f32 %v988, %v1072
  %v1074 = vpop.f32.mrb[0].mxu0
  %v1075 = vadd.f32 %v992, %v1074
  %1076 = vdwg.mxu0
  %v1079 = vcombine.low %v1073, %v1075
  %v1081 = vunpack.c.l.s4 1983009808
  %v1082 = vunpack.c.0.s8 %v1081
  %v1083 = vlaneseq
  %v1084 = vshrl.u32 %v1083, 7
  %v1085 = vsub.s32 %v1082, %v1084
  %v1086 = vrot.slane %v1079, %v1085
  %1088 = vst [vmem:[%s9] sm:$0xf] %v1086
  // Predicated region
  $region38: #{yolov1_small_qat_forward.1} parent=0 // pred_check
    _
  $region39: #{yolov1_small_qat_forward.1} parent=0 // pred_check_branch
    %1090 = sbr.rel (0) target = $region41
  $region40: #{yolov1_small_qat_forward.1} parent=0 // pred_region
    _
  $region41: #{yolov1_small_qat_forward.1} parent=0 // pred_fallthru
    _
  // Predicated region
  $region42: #{yolov1_small_qat_forward.1} parent=0 // pred_check
    _
  $region43: #{yolov1_small_qat_forward.1} parent=0 // pred_check_branch
    %1092 = sbr.rel (0) target = $region45
  $region44: #{yolov1_small_qat_forward.1} parent=0 // pred_region
    _
  $region45: #{yolov1_small_qat_forward.1} parent=0 // pred_fallthru
    _

</llo_original>
